<compile_context>
chip_gen: v7x
topology: tpu7x:2x2x1
jax: 0.10.0
libtpu: 0.0.40
codegen_flags: <defaults>
</compile_context>

<pallas_src>
import jax
import jax.numpy as jnp
from jax.experimental import pallas as pl
from jax.experimental.pallas import tpu as pltpu

LANE = 128
_NEG = -1e30  # effectively -inf for the masked log_softmax over lane padding


# ---------------------------------------------------------------------------
# Fused kernel
# ---------------------------------------------------------------------------

def _make_fused_kernel(tm, tk, out_dim):
    def kernel(a_ref, x_ref, wc_ref, bc_ref, w12_ref, b12_ref, o_ref,
               x_scr, xw_scr, acc_scr):
        l = pl.program_id(0)            # layer
        i = pl.program_id(1)            # destination-row tile
        k = pl.program_id(2)            # source-node (contraction) tile
        num_layers = pl.num_programs(0)
        nk = pl.num_programs(2)

        # One-time: bring raw node features into the resident VMEM scratch.
        @pl.when((l == 0) & (i == 0) & (k == 0))
        def _load_x():
            x_scr[...] = x_ref[...]

        # Hoisted per-layer X @ W (reused by every row/k tile of this layer).
        @pl.when((i == 0) & (k == 0))
        def _hoist_xw():
            xw_scr[...] = jnp.dot(x_scr[...], wc_ref[l],
                                  preferred_element_type=jnp.float32)

        # Init the per-row-tile accumulator at the start of the K reduction.
        @pl.when(k == 0)
        def _init_acc():
            acc_scr[...] = jnp.zeros_like(acc_scr)

        # Accumulate A[i rows, k cols] @ (X W)[k rows, :] on the MXU
        # (bf16 operands, f32 accumulation).
        koff = pl.multiple_of(k * tk, tk)
        xw_k = xw_scr[pl.ds(koff, tk), :].astype(jnp.bfloat16)
        acc_scr[...] += jnp.dot(a_ref[...], xw_k,
                                preferred_element_type=jnp.float32)

        # Finalize (hidden layers): bias + ReLU (dropout = identity), write the
        # new feature rows back into the resident scratch for the next layer.
        @pl.when((k == nk - 1) & (l < num_layers - 1))
        def _store_hidden():
            h = jnp.maximum(acc_scr[...] + bc_ref[l], 0.0)
            roff = pl.multiple_of(i * tm, tm)
            x_scr[pl.ds(roff, tm), :] = h

        # Finalize (last layer): collapsed post_mp head + masked log_softmax,
        # lane-dense output write.
        @pl.when((k == nk - 1) & (l == num_layers - 1))
        def _head():
            h = jnp.maximum(acc_scr[...] + bc_ref[l], 0.0)
            y = jnp.dot(h, w12_ref[...],
                        preferred_element_type=jnp.float32) + b12_ref[...]
            col = jax.lax.broadcasted_iota(jnp.int32, y.shape, 1)
            y = jnp.where(col < out_dim, y, _NEG)        # mask lane padding
            m = jnp.max(y, axis=-1, keepdims=True)
            z = y - m
            lse = jnp.log(jnp.sum(jnp.exp(z), axis=-1, keepdims=True))
            o_ref[0] = z - lse

    return kernel


# ---------------------------------------------------------------------------
# Wrapper / glue
# ---------------------------------------------------------------------------

def _round_up(n, m):
    return m * pl.cdiv(n, m)


def _pad2(a, rows, cols):
    return jnp.pad(a, ((0, rows - a.shape[0]), (0, cols - a.shape[1])))


def build_norm_adj(edge_index, num_nodes):
    """Dense GCN-normalized adjacency D^-1/2 (A + I_missing) D^-1/2.

    Built ONCE per graph (hoisted out of the forward hot path).  Scatter-add
    keeps duplicate-edge multiplicity (PyG semantics); self loops are added
    only where missing (add_remaining_self_loops)."""
    src, dst = edge_index[0], edge_index[1]
    a = jnp.zeros((num_nodes, num_nodes), jnp.float32)
    a = a.at[dst, src].add(1.0)                         # aggregate src -> dst
    diag = jnp.diagonal(a)
    a = a + jnp.diag(jnp.where(diag > 0.0, 0.0, 1.0))   # remaining self loops
    deg = jnp.sum(a, axis=1)
    dinv = jnp.where(deg > 0.0, jax.lax.rsqrt(deg), 0.0)
    return dinv[:, None] * a * dinv[None, :]


def gnn_forward(params, x, a_norm):
    """Fused Pallas forward.  `a_norm` is the (precomputed) dense normalized
    adjacency for the graph."""
    n, in_dim = x.shape
    convs = params["convs"]
    w1, b1, w2, b2 = params["post_mp"]
    hidden = convs[0][0].shape[1]
    out_dim = w2.shape[1]
    num_layers = len(convs)
    assert num_layers >= 1, "Number of layers is not >=1"

    f_pad = _round_up(max(in_dim, hidden), LANE)
    out_pad = _round_up(out_dim, LANE)
    n_pad = _round_up(n, LANE)

    # Tile sizes: 256/512 when the padded node count allows, else 128.
    tm = 256 if n_pad % 256 == 0 else 128
    tk = 512 if n_pad % 512 == 0 else (256 if n_pad % 256 == 0 else 128)

    # ---- pad / pack operands (lane-dense; bf16 adjacency) -------------------
    a_p = _pad2(a_norm.astype(jnp.float32), n_pad, n_pad).astype(jnp.bfloat16)
    x_p = _pad2(x.astype(jnp.float32), n_pad, f_pad)
    wc = jnp.stack([_pad2(w, f_pad, f_pad) for (w, _) in convs])
    bc = jnp.stack([_pad2(b, 1, f_pad) for (_, b) in convs])
    # Collapse post_mp (exact in eval mode: dropout = identity, no nonlinearity).
    w12 = _pad2(w1 @ w2, f_pad, out_pad)
    b12 = _pad2(b1 @ w2 + b2, 1, out_pad)

    grid = (num_layers, n_pad // tm, n_pad // tk)
    kernel = _make_fused_kernel(tm, tk, out_dim)

    out = pl.pallas_call(
        kernel,
        # Leading `num_layers` dim keeps every output block single-visit; only
        # the last layer's slab holds real data (sliced below).
        out_shape=jax.ShapeDtypeStruct((num_layers, n_pad, out_pad), jnp.float32),
        grid_spec=pltpu.PrefetchScalarGridSpec(
            num_scalar_prefetch=0,
            grid=grid,
            in_specs=[
                pl.BlockSpec((tm, tk), lambda l, i, k: (i, k)),         # A tiles
                pl.BlockSpec((n_pad, f_pad), lambda l, i, k: (0, 0)),   # x (fetched once)
                pl.BlockSpec((num_layers, f_pad, f_pad), lambda l, i, k: (0, 0, 0)),
                pl.BlockSpec((num_layers, 1, f_pad), lambda l, i, k: (0, 0, 0)),
                pl.BlockSpec((f_pad, out_pad), lambda l, i, k: (0, 0)),
                pl.BlockSpec((1, out_pad), lambda l, i, k: (0, 0)),
            ],
            out_specs=pl.BlockSpec((1, tm, out_pad), lambda l, i, k: (l, i, 0)),
            scratch_shapes=[
                pltpu.VMEM((n_pad, f_pad), jnp.float32),   # resident node features
                pltpu.VMEM((n_pad, f_pad), jnp.float32),   # hoisted X @ W
                pltpu.VMEM((tm, f_pad), jnp.float32),      # A @ XW row-tile accumulator
            ],
        ),
        compiler_params=pltpu.CompilerParams(
            # Row/K axes carry state in VMEM scratch across the fused layer
            # loop, so all axes must stay "arbitrary" (see TODO re v7x 2 TCs).
            dimension_semantics=("arbitrary", "arbitrary", "arbitrary"),
            vmem_limit_bytes=32 * 1024 * 1024,   # explicit, safe on v5e/v6e/v7x
        ),
    )(a_p, x_p, wc, bc, w12, b12)

    return out[num_layers - 1, :n, :out_dim]


# ---------------------------------------------------------------------------
# Parameters & pure-JAX references
# ---------------------------------------------------------------------------

def init_params(key, input_dim, hidden_dim, output_dim, num_layers):
    ks = jax.random.split(key, 2 * (num_layers + 2))
    convs = []
    d_in = input_dim
    ki = 0
    for _ in range(num_layers):
        w = 0.1 * jax.random.normal(ks[ki], (d_in, hidden_dim), jnp.float32); ki += 1
        b = 0.1 * jax.random.normal(ks[ki], (1, hidden_dim), jnp.float32); ki += 1
        convs.append((w, b))
        d_in = hidden_dim
    w1 = 0.1 * jax.random.normal(ks[ki], (hidden_dim, hidden_dim), jnp.float32); ki += 1
    b1 = 0.1 * jax.random.normal(ks[ki], (1, hidden_dim), jnp.float32); ki += 1
    w2 = 0.1 * jax.random.normal(ks[ki], (hidden_dim, output_dim), jnp.float32); ki += 1
    b2 = 0.1 * jax.random.normal(ks[ki], (1, output_dim), jnp.float32); ki += 1
    return {"convs": convs, "post_mp": (w1, b1, w2, b2)}


def gnn_forward_ref_f32(params, x, a_norm):
    """Exact eval-mode math of the PyTorch module, full f32."""
    for (w, b) in params["convs"]:
        x = jnp.maximum(a_norm @ (x @ w) + b, 0.0)
    w1, b1, w2, b2 = params["post_mp"]
    y = (x @ w1 + b1) @ w2 + b2
    return jax.nn.log_softmax(y, axis=1)


def gnn_forward_ref_matched(params, x, a_norm):
    """Reference mirroring the kernel's dtype choices (bf16 A / bf16 XW into
    the aggregation matmul, f32 accumulation, collapsed post_mp)."""
    a = a_norm.astype(jnp.bfloat16)
    for (w, b) in params["convs"]:
        xw = (x @ w).astype(jnp.bfloat16)
        x = jnp.maximum(jnp.dot(a, xw, preferred_element_type=jnp.float32) + b, 0.0)
    w1, b1, w2, b2 = params["post_mp"]
    y = x @ (w1 @ w2) + (b1 @ w2 + b2)
    return jax.nn.log_softmax(y, axis=1)


if __name__ == "__main__":
    # Small synthetic graph: 8 nodes on an undirected ring, 16-d inputs.
    num_nodes = 8
    input_dim = 16
    hidden_dim = 32
    output_dim = 8
    num_layers = 2

    key = jax.random.PRNGKey(0)
    k_x, k_p = jax.random.split(key)

    x = jax.random.normal(k_x, (num_nodes, input_dim), jnp.float32)
    src = jnp.arange(num_nodes, dtype=jnp.int32)
    dst = (src + 1) % num_nodes
    edge_index = jnp.stack(
        [jnp.concatenate([src, dst]), jnp.concatenate([dst, src])], axis=0
    )  # (2, 2*N) undirected ring

    params = init_params(k_p, input_dim, hidden_dim, output_dim, num_layers)

    # Adjacency precomputed once per graph (out of the forward hot path).
    a_norm = build_norm_adj(edge_index, num_nodes)

    out = gnn_forward(params, x, a_norm)
    out = jax.block_until_ready(out)

    assert out.shape == (num_nodes, output_dim)

    # Tight check vs a reference with the same dtype choices as the kernel.
    ref_m = gnn_forward_ref_matched(params, x, a_norm)
    assert jnp.allclose(out, ref_m, atol=1e-4, rtol=1e-4), "mismatch vs matched ref"

    # Loose sanity check vs full-f32 math (bf16 adjacency introduces ~1e-3 err).
    ref_f = gnn_forward_ref_f32(params, x, a_norm)
    assert jnp.allclose(out, ref_f, atol=5e-2, rtol=5e-2), "mismatch vs f32 ref"

    print("KERNEL_OK")
</pallas_src>

<mosaic_0001>
module attributes {stable_mosaic.version = 11 : i64} {
  func.func @kernel(%arg0: i32, %arg1: i32, %arg2: i32, %arg3: memref<128x128xbf16, #tpu.memory_space<vmem>>, %arg4: memref<128x128xf32, #tpu.memory_space<vmem>>, %arg5: memref<2x128x128xf32, #tpu.memory_space<vmem>>, %arg6: memref<2x1x128xf32, #tpu.memory_space<vmem>>, %arg7: memref<128x128xf32, #tpu.memory_space<vmem>>, %arg8: memref<1x128xf32, #tpu.memory_space<vmem>>, %arg9: memref<1x128x128xf32, #tpu.memory_space<vmem>>, %arg10: memref<128x128xf32, #tpu.memory_space<vmem>>, %arg11: memref<128x128xf32, #tpu.memory_space<vmem>>, %arg12: memref<128x128xf32, #tpu.memory_space<vmem>>) attributes {dimension_semantics = [#tpu.dimension_semantics<arbitrary>, #tpu.dimension_semantics<arbitrary>, #tpu.dimension_semantics<arbitrary>], iteration_bounds = array<i64: 2, 1, 1>, scalar_prefetch = 0 : i64, scratch_operands = 3 : i64, tpu.core_type = #tpu.core_type<tc>, window_params = [{transform_indices = @transform_0, window_bounds = array<i64: 128, 128>}, {pipeline_mode = #tpu.pipeline_mode<synchronous>, transform_indices = @transform_1, window_bounds = array<i64: 128, 128>}, {pipeline_mode = #tpu.pipeline_mode<synchronous>, transform_indices = @transform_2, window_bounds = array<i64: 2, 128, 128>}, {pipeline_mode = #tpu.pipeline_mode<synchronous>, transform_indices = @transform_3, window_bounds = array<i64: 2, 1, 128>}, {pipeline_mode = #tpu.pipeline_mode<synchronous>, transform_indices = @transform_4, window_bounds = array<i64: 128, 128>}, {pipeline_mode = #tpu.pipeline_mode<synchronous>, transform_indices = @transform_5, window_bounds = array<i64: 1, 128>}, {transform_indices = @transform_6, window_bounds = array<i64: 1, 128, 128>}]} {
    %c0_i32 = arith.constant 0 : i32
    %0 = arith.cmpi eq, %arg0, %c0_i32 : i32
    %c0_i32_0 = arith.constant 0 : i32
    %1 = arith.cmpi eq, %arg1, %c0_i32_0 : i32
    %2 = arith.andi %0, %1 : i1
    %c0_i32_1 = arith.constant 0 : i32
    %3 = arith.cmpi eq, %arg2, %c0_i32_1 : i32
    %4 = arith.andi %2, %3 : i1
    %5 = arith.extui %4 : i1 to i32
    %c0_i32_2 = arith.constant 0 : i32
    %6 = arith.cmpi ne, %5, %c0_i32_2 : i32
    scf.if %6 {
      %c0_19 = arith.constant 0 : index
      %c0_20 = arith.constant 0 : index
      %35 = vector.load %arg4[%c0_19, %c0_20] : memref<128x128xf32, #tpu.memory_space<vmem>>, vector<128x128xf32>
      %c0_21 = arith.constant 0 : index
      %c0_22 = arith.constant 0 : index
      %36 = vector.load %arg10[%c0_21, %c0_22] : memref<128x128xf32, #tpu.memory_space<vmem>>, vector<128x128xf32>
      tpu.vector_store %arg10[%c0_21, %c0_22], %35 {strides = array<i32>} : memref<128x128xf32, #tpu.memory_space<vmem>>, vector<128x128xf32>,
    } else {
    }
    %c0_i32_3 = arith.constant 0 : i32
    %7 = arith.cmpi eq, %arg1, %c0_i32_3 : i32
    %c0_i32_4 = arith.constant 0 : i32
    %8 = arith.cmpi eq, %arg2, %c0_i32_4 : i32
    %9 = arith.andi %7, %8 : i1
    %10 = arith.extui %9 : i1 to i32
    %c0_i32_5 = arith.constant 0 : i32
    %11 = arith.cmpi ne, %10, %c0_i32_5 : i32
    scf.if %11 {
      %c0_19 = arith.constant 0 : index
      %c0_20 = arith.constant 0 : index
      %35 = vector.load %arg10[%c0_19, %c0_20] : memref<128x128xf32, #tpu.memory_space<vmem>>, vector<128x128xf32>
      %36 = arith.index_cast %arg0 : i32 to index
      %c0_21 = arith.constant 0 : index
      %c0_22 = arith.constant 0 : index
      %37 = vector.load %arg5[%36, %c0_21, %c0_22] : memref<2x128x128xf32, #tpu.memory_space<vmem>>, vector<1x128x128xf32>
      %38 = vector.shape_cast %37 : vector<1x128x128xf32> to vector<128x128xf32>
      %cst_23 = arith.constant dense<0.000000e+00> : vector<128x128xf32>
      %39 = tpu.matmul %35, %38, %cst_23 {dimension_numbers = #tpu.dot_dimension_numbers<[1], [0], [0], [1], [0, 0, 1, 1], [], []>} : vector<128x128xf32>, vector<128x128xf32>, vector<128x128xf32> -> vector<128x128xf32>
      %c0_24 = arith.constant 0 : index
      %c0_25 = arith.constant 0 : index
      %40 = vector.load %arg11[%c0_24, %c0_25] : memref<128x128xf32, #tpu.memory_space<vmem>>, vector<128x128xf32>
      tpu.vector_store %arg11[%c0_24, %c0_25], %39 {strides = array<i32>} : memref<128x128xf32, #tpu.memory_space<vmem>>, vector<128x128xf32>,
    } else {
    }
    %c0_i32_6 = arith.constant 0 : i32
    %12 = arith.cmpi eq, %arg2, %c0_i32_6 : i32
    %13 = arith.extui %12 : i1 to i32
    %c0_i32_7 = arith.constant 0 : i32
    %14 = arith.cmpi ne, %13, %c0_i32_7 : i32
    scf.if %14 {
      %cst_19 = arith.constant 0.000000e+00 : f32
      %35 = vector.broadcast %cst_19 : f32 to vector<128x128xf32>
      %c0_20 = arith.constant 0 : index
      %c0_21 = arith.constant 0 : index
      %36 = vector.load %arg12[%c0_20, %c0_21] : memref<128x128xf32, #tpu.memory_space<vmem>>, vector<128x128xf32>
      tpu.vector_store %arg12[%c0_20, %c0_21], %35 {strides = array<i32>} : memref<128x128xf32, #tpu.memory_space<vmem>>, vector<128x128xf32>,
    } else {
    }
    %c128_i32 = arith.constant 128 : i32
    %15 = arith.muli %arg2, %c128_i32 : i32
    %16 = tpu.assume_multiple %15, 128 : i32
    %17 = arith.index_cast %16 : i32 to index
    %c0 = arith.constant 0 : index
    %18 = vector.load %arg11[%17, %c0] : memref<128x128xf32, #tpu.memory_space<vmem>>, vector<128x128xf32>
    %19 = arith.truncf %18 : vector<128x128xf32> to vector<128x128xbf16>
    %c0_8 = arith.constant 0 : index
    %c0_9 = arith.constant 0 : index
    %20 = vector.load %arg12[%c0_8, %c0_9] : memref<128x128xf32, #tpu.memory_space<vmem>>, vector<128x128xf32>
    %c0_10 = arith.constant 0 : index
    %c0_11 = arith.constant 0 : index
    %21 = vector.load %arg3[%c0_10, %c0_11] : memref<128x128xbf16, #tpu.memory_space<vmem>>, vector<128x128xbf16>
    %cst = arith.constant dense<0.000000e+00> : vector<128x128xf32>
    %22 = tpu.matmul %21, %19, %cst {dimension_numbers = #tpu.dot_dimension_numbers<[1], [0], [0], [1], [0, 0, 1, 1], [], []>} : vector<128x128xbf16>, vector<128x128xbf16>, vector<128x128xf32> -> vector<128x128xf32>
    %23 = arith.addf %20, %22 : vector<128x128xf32>
    %c0_12 = arith.constant 0 : index
    %c0_13 = arith.constant 0 : index
    %24 = vector.load %arg12[%c0_12, %c0_13] : memref<128x128xf32, #tpu.memory_space<vmem>>, vector<128x128xf32>
    tpu.vector_store %arg12[%c0_12, %c0_13], %23 {strides = array<i32>} : memref<128x128xf32, #tpu.memory_space<vmem>>, vector<128x128xf32>,
    %c0_i32_14 = arith.constant 0 : i32
    %25 = arith.cmpi eq, %arg2, %c0_i32_14 : i32
    %c1_i32 = arith.constant 1 : i32
    %26 = arith.cmpi slt, %arg0, %c1_i32 : i32
    %27 = arith.andi %25, %26 : i1
    %28 = arith.extui %27 : i1 to i32
    %c0_i32_15 = arith.constant 0 : i32
    %29 = arith.cmpi ne, %28, %c0_i32_15 : i32
    scf.if %29 {
      %c0_19 = arith.constant 0 : index
      %c0_20 = arith.constant 0 : index
      %35 = vector.load %arg12[%c0_19, %c0_20] : memref<128x128xf32, #tpu.memory_space<vmem>>, vector<128x128xf32>
      %36 = arith.index_cast %arg0 : i32 to index
      %c0_21 = arith.constant 0 : index
      %c0_22 = arith.constant 0 : index
      %37 = vector.load %arg6[%36, %c0_21, %c0_22] : memref<2x1x128xf32, #tpu.memory_space<vmem>>, vector<1x1x128xf32>
      %38 = vector.shape_cast %37 : vector<1x1x128xf32> to vector<1x128xf32>
      %39 = vector.broadcast %38 : vector<1x128xf32> to vector<128x128xf32>
      %40 = arith.addf %35, %39 : vector<128x128xf32>
      %cst_23 = arith.constant 0.000000e+00 : f32
      %41 = vector.broadcast %cst_23 : f32 to vector<128x128xf32>
      %42 = arith.maximumf %40, %41 : vector<128x128xf32>
      %c128_i32_24 = arith.constant 128 : i32
      %43 = arith.muli %arg1, %c128_i32_24 : i32
      %44 = tpu.assume_multiple %43, 128 : i32
      %45 = arith.index_cast %44 : i32 to index
      %c0_25 = arith.constant 0 : index
      %46 = vector.load %arg10[%45, %c0_25] : memref<128x128xf32, #tpu.memory_space<vmem>>, vector<128x128xf32>
      tpu.vector_store %arg10[%45, %c0_25], %42 {strides = array<i32>} : memref<128x128xf32, #tpu.memory_space<vmem>>, vector<128x128xf32>,
    } else {
    }
    %c0_i32_16 = arith.constant 0 : i32
    %30 = arith.cmpi eq, %arg2, %c0_i32_16 : i32
    %c1_i32_17 = arith.constant 1 : i32
    %31 = arith.cmpi eq, %arg0, %c1_i32_17 : i32
    %32 = arith.andi %30, %31 : i1
    %33 = arith.extui %32 : i1 to i32
    %c0_i32_18 = arith.constant 0 : i32
    %34 = arith.cmpi ne, %33, %c0_i32_18 : i32
    scf.if %34 {
      %c0_19 = arith.constant 0 : index
      %c0_20 = arith.constant 0 : index
      %35 = vector.load %arg12[%c0_19, %c0_20] : memref<128x128xf32, #tpu.memory_space<vmem>>, vector<128x128xf32>
      %36 = arith.index_cast %arg0 : i32 to index
      %c0_21 = arith.constant 0 : index
      %c0_22 = arith.constant 0 : index
      %37 = vector.load %arg6[%36, %c0_21, %c0_22] : memref<2x1x128xf32, #tpu.memory_space<vmem>>, vector<1x1x128xf32>
      %38 = vector.shape_cast %37 : vector<1x1x128xf32> to vector<1x128xf32>
      %39 = vector.broadcast %38 : vector<1x128xf32> to vector<128x128xf32>
      %40 = arith.addf %35, %39 : vector<128x128xf32>
      %cst_23 = arith.constant 0.000000e+00 : f32
      %41 = vector.broadcast %cst_23 : f32 to vector<128x128xf32>
      %42 = arith.maximumf %40, %41 : vector<128x128xf32>
      %c0_24 = arith.constant 0 : index
      %c0_25 = arith.constant 0 : index
      %43 = vector.load %arg7[%c0_24, %c0_25] : memref<128x128xf32, #tpu.memory_space<vmem>>, vector<128x128xf32>
      %cst_26 = arith.constant dense<0.000000e+00> : vector<128x128xf32>
      %44 = tpu.matmul %42, %43, %cst_26 {dimension_numbers = #tpu.dot_dimension_numbers<[1], [0], [0], [1], [0, 0, 1, 1], [], []>} : vector<128x128xf32>, vector<128x128xf32>, vector<128x128xf32> -> vector<128x128xf32>
      %c0_27 = arith.constant 0 : index
      %c0_28 = arith.constant 0 : index
      %45 = vector.load %arg8[%c0_27, %c0_28] : memref<1x128xf32, #tpu.memory_space<vmem>>, vector<1x128xf32>
      %46 = vector.broadcast %45 : vector<1x128xf32> to vector<128x128xf32>
      %47 = arith.addf %44, %46 : vector<128x128xf32>
      %48 = tpu.iota {dimensions = array<i32: 1>} : vector<128x128xi32>
      %c8_i32 = arith.constant 8 : i32
      %49 = vector.broadcast %c8_i32 : i32 to vector<128x128xi32>
      %50 = arith.cmpi slt, %48, %49 : vector<128x128xi32>
      %cst_29 = arith.constant -1.000000e+30 : f32
      %51 = vector.broadcast %cst_29 : f32 to vector<128x128xf32>
      %52 = arith.select %50, %47, %51 : vector<128x128xi1>, vector<128x128xf32>
      %cst_30 = arith.constant dense<0xFF800000> : vector<128xf32>
      %53 = vector.multi_reduction <maximumf>, %52, %cst_30 [1] : vector<128x128xf32> to vector<128xf32>
      %54 = vector.shape_cast %53 : vector<128xf32> to vector<128x1xf32>
      %55 = vector.broadcast %54 : vector<128x1xf32> to vector<128x128xf32>
      %56 = arith.subf %52, %55 : vector<128x128xf32>
      %57 = math.exp %56 : vector<128x128xf32>
      %cst_31 = arith.constant dense<0.000000e+00> : vector<128xf32>
      %58 = vector.multi_reduction <add>, %57, %cst_31 [1] : vector<128x128xf32> to vector<128xf32>
      %59 = vector.shape_cast %58 : vector<128xf32> to vector<128x1xf32>
      %60 = math.log %59 : vector<128x1xf32>
      %61 = vector.broadcast %60 : vector<128x1xf32> to vector<128x128xf32>
      %62 = arith.subf %56, %61 : vector<128x128xf32>
      %c0_32 = arith.constant 0 : index
      %c0_33 = arith.constant 0 : index
      %c0_34 = arith.constant 0 : index
      %63 = vector.load %arg9[%c0_32, %c0_33, %c0_34] : memref<1x128x128xf32, #tpu.memory_space<vmem>>, vector<1x128x128xf32>
      %64 = vector.shape_cast %63 : vector<1x128x128xf32> to vector<128x128xf32>
      %65 = vector.shape_cast %62 : vector<128x128xf32> to vector<1x128x128xf32>
      tpu.vector_store %arg9[%c0_32, %c0_33, %c0_34], %65 {strides = array<i32>} : memref<1x128x128xf32, #tpu.memory_space<vmem>>, vector<1x128x128xf32>,
    } else {
    }
    return
  }
  func.func @transform_0(%arg0: i32, %arg1: i32, %arg2: i32) -> (i32, i32) {
    %c0_i32 = arith.constant 0 : i32
    return %arg1, %arg2 : i32, i32
  }
  func.func @transform_1(%arg0: i32, %arg1: i32, %arg2: i32) -> (i32, i32) {
    %c0_i32 = arith.constant 0 : i32
    %c0_i32_0 = arith.constant 0 : i32
    %c0_i32_1 = arith.constant 0 : i32
    return %c0_i32, %c0_i32_0 : i32, i32
  }
  func.func @transform_2(%arg0: i32, %arg1: i32, %arg2: i32) -> (i32, i32, i32) {
    %c0_i32 = arith.constant 0 : i32
    %c0_i32_0 = arith.constant 0 : i32
    %c0_i32_1 = arith.constant 0 : i32
    %c0_i32_2 = arith.constant 0 : i32
    return %c0_i32, %c0_i32_0, %c0_i32_1 : i32, i32, i32
  }
  func.func @transform_3(%arg0: i32, %arg1: i32, %arg2: i32) -> (i32, i32, i32) {
    %c0_i32 = arith.constant 0 : i32
    %c0_i32_0 = arith.constant 0 : i32
    %c0_i32_1 = arith.constant 0 : i32
    %c0_i32_2 = arith.constant 0 : i32
    return %c0_i32, %c0_i32_0, %c0_i32_1 : i32, i32, i32
  }
  func.func @transform_4(%arg0: i32, %arg1: i32, %arg2: i32) -> (i32, i32) {
    %c0_i32 = arith.constant 0 : i32
    %c0_i32_0 = arith.constant 0 : i32
    %c0_i32_1 = arith.constant 0 : i32
    return %c0_i32, %c0_i32_0 : i32, i32
  }
  func.func @transform_5(%arg0: i32, %arg1: i32, %arg2: i32) -> (i32, i32) {
    %c0_i32 = arith.constant 0 : i32
    %c0_i32_0 = arith.constant 0 : i32
    %c0_i32_1 = arith.constant 0 : i32
    return %c0_i32, %c0_i32_0 : i32, i32
  }
  func.func @transform_6(%arg0: i32, %arg1: i32, %arg2: i32) -> (i32, i32, i32) {
    %c0_i32 = arith.constant 0 : i32
    %c0_i32_0 = arith.constant 0 : i32
    return %arg0, %arg1, %c0_i32 : i32, i32, i32
  }
}

</mosaic_0001>

<llo_original>
// kernel: tpu_custom_call.1
$region0: #{tpu_custom_call.1}
  #allocation0 [shape = 'u32[]', space=smem, size = 0x4, offset = 0x4, fixed_abs, tag = 'smem constant byte address 0x4 - core index']
  #allocation1 [shape = 'u32[144,128]{1,0:T(1,128)}', space=vmem, size = 0x12000, scoped, tag = 'internal scratch']
  #allocation2 [shape = 'f32[128,128]{1,0:T(8,128)}', space=vmem, size = 0x10000, scoped, tag = 'scratch operand']
  #allocation3 [shape = 'f32[128,128]{1,0:T(8,128)}', space=vmem, size = 0x10000, scoped, tag = 'scratch operand']
  #allocation4 [shape = 'f32[128,128]{1,0:T(8,128)}', space=vmem, size = 0x10000, scoped, tag = 'scratch operand']
  %s0 = inlined_call_operand.hbm [shape: bf16[128,128], index: 0, kind: input, shape index: {}]
  %s1 = inlined_call_operand.hbm [shape: f32[128,128], index: 1, kind: input, shape index: {}]
  %s2 = inlined_call_operand.hbm [shape: f32[2,128,128], index: 2, kind: input, shape index: {}]
  %s3 = inlined_call_operand.vmem [shape: f32[2,1,128], index: 3, kind: input, shape index: {}]
  %s4 = inlined_call_operand.hbm [shape: f32[128,128], index: 4, kind: input, shape index: {}]
  %s5 = inlined_call_operand.vmem [shape: f32[1,128], index: 5, kind: input, shape index: {}]
  %s6 = inlined_call_operand.hbm [shape: f32[2,128,128], index: 6, kind: output, shape index: {}]
  %s7 = sld [smem:[#allocation0]]
  $region93: #{tpu_custom_call.1} parent=0
    _
  %s9 = ssub.s32 1, %s7
  %s10 = scalar_select 0, %s9, %s7
  $region1: #{tpu_custom_call.1} parent=0
    #allocation5 [shape = 'u8[32768]{0}', space=vmem, size = 0x8000, scoped, tag = 'input window, operand 0, single buffered']
    #allocation6 [shape = 's32[2]{0}', space=sflag, size = 0x8, scoped, tag = 'scoped memory for tpu_custom_call.1']
    #allocation7 [shape = 's32[2]{0}', space=sflag, size = 0x8, scoped, tag = 'scoped memory for tpu_custom_call.1']
    #allocation8 [shape = 'u8[65536]{0}', space=vmem, size = 0x10000, scoped, tag = 'input window, operand 1, single buffered']
    #allocation9 [shape = 's32[1]{0}', space=sflag, size = 0x4, scoped, tag = 'scoped memory for tpu_custom_call.1']
    #allocation10 [shape = 'u8[131072]{0}', space=vmem, size = 0x20000, scoped, tag = 'input window, operand 2, single buffered']
    #allocation11 [shape = 'u8[65536]{0}', space=vmem, size = 0x10000, scoped, tag = 'input window, operand 4, single buffered']
    #allocation12 [shape = 's32[1]{0}', space=sflag, size = 0x4, scoped, tag = 'scoped memory for tpu_custom_call.1']
    #allocation13 [shape = 'u8[131072]{0}', space=vmem, size = 0x20000, scoped, tag = 'output window, operand 0']
    %11 = vsyncpa [#allocation6], 0
    %12 = vsyncpa [#allocation9], 0
    %13 = vsyncpa [#allocation12], 0
    %14 = vsyncpa [#allocation7], 0
    %s15 = scalar_lea.sflag [#allocation7], 1
    %16 = vsyncpa %s15, 0
    loop: start=0, step=1, limit=4
    $region2: #{tpu_custom_call.1} parent=1 // loop_pre_header
      _
    $region3: #{tpu_custom_call.1} parent=1 // loop_header
      %s18 = sphi 0, %s22
      %p19 = scmp.ge.s32.totalorder %s18, 4
      %s25 = sphi 0, %s44
      %s26 = sphi 0, %s40
      %s27 = sphi 0, %s36
      %s28 = sphi 0, %s25
      %s29 = sphi 0, %s26
      %s30 = sphi 0, %s27
      %s31 = sphi 0, %s28
      %s32 = sphi 0, %s29
      %s33 = sphi 0, %s30
      %s49 = sphi 0, %s51
      %s52 = sphi 0, %s49
      %s53 = sphi 0, %s52
      %s69 = sphi 0, %s53
      %s73 = sphi 0, %s73
      %s75 = sphi 0, %s73
      %s76 = sphi 0, %s75
      %s90 = sphi 0, %s76
      %s94 = sphi 0, %s94
      %s96 = sphi 0, %s94
      %s97 = sphi 0, %s96
      %s111 = sphi 0, %s97
      %s115 = sphi 0, %s115
      %s117 = sphi 0, %s115
      %s118 = sphi 0, %s117
      %s132 = sphi 0, %s118
      %s136 = sphi 0, %s136
      %s138 = sphi 0, %s136
      %s139 = sphi 0, %s138
      %s153 = sphi 0, %s139
      %s157 = sphi 0, %s157
      %s159 = sphi 0, %s157
      %s160 = sphi 0, %s159
      %s174 = sphi 0, %s160
      %s182 = sphi 0, %s184
      %s185 = sphi 0, %s182
      %s186 = sphi 0, %s185
      %s202 = sphi 0, %s186
    $region4: #{tpu_custom_call.1} parent=1 // loop_header_branch
      %21 = sbr.rel (%p19) target = $region8
    $region5: #{tpu_custom_call.1} parent=1 // loop_body
      %s23 = ssub.s32 %s18, 1
      %s24 = ssub.s32 %s18, 2
      %s34 = sadd.s32 1, %s27
      %p35 = scmp.ge.s32.totalorder %s34, 1
      %s36 = scalar_select %p35, 0, %s34
      %s37 = sadd.s32 1, %s26
      %s38 = scalar_select %p35, %s37, %s26
      %p39 = scmp.ge.s32.totalorder %s38, 1
      %s40 = scalar_select %p39, 0, %s38
      %s41 = sadd.s32 1, %s25
      %s42 = scalar_select %p39, %s41, %s25
      %p43 = scmp.ge.s32.totalorder %s42, 2
      %s44 = scalar_select %p43, 0, %s42
      %s45 = ssub.s32 %s26, %s40
      %s46 = ssub.s32 %s27, %s36
      %s47 = sor.u32 %s45, %s46
      %p48 = scmp.eq.s32.totalorder %s47, 0
      %s50 = sadd.s32 %s49, 1
      %s51 = scalar_select %p48, %s49, %s50
      %p54 = pneg %p48
      %p55 = scmp.eq.s32.totalorder %s18, 1
      %p56 = por %p54, %p55
      %p57 = scmp.ne.s32.totalorder %s49, %s52
      %p58 = scmp.eq.s32.totalorder %s18, 0
      %p59 = por %p57, %p58
      %p60 = scmp.ne.s32.totalorder %s49, %s52
      %p61 = scmp.eq.s32.totalorder %s23, 1
      %p62 = por %p60, %p61
      %p63 = scmp.ne.s32.totalorder %s52, %s53
      %p64 = scmp.eq.s32.totalorder %s23, 0
      %p65 = por %p63, %p64
      %p66 = scmp.ne.s32.totalorder %s52, %s53
      %p67 = scmp.eq.s32.totalorder %s24, 1
      %p68 = por %p66, %p67
      %p70 = scmp.ne.s32.totalorder %s53, %s69
      %p71 = scmp.eq.s32.totalorder %s24, 0
      %p72 = por %p70, %p71
      %s74 = sadd.s32 %s73, 1
      %p77 = scmp.eq.s32.totalorder %s18, 1
      %p78 = scmp.ne.s32.totalorder %s73, %s75
      %p79 = scmp.eq.s32.totalorder %s18, 0
      %p80 = por %p78, %p79
      %p81 = scmp.ne.s32.totalorder %s73, %s75
      %p82 = scmp.eq.s32.totalorder %s23, 1
      %p83 = por %p81, %p82
      %p84 = scmp.ne.s32.totalorder %s75, %s76
      %p85 = scmp.eq.s32.totalorder %s23, 0
      %p86 = por %p84, %p85
      %p87 = scmp.ne.s32.totalorder %s75, %s76
      %p88 = scmp.eq.s32.totalorder %s24, 1
      %p89 = por %p87, %p88
      %p91 = scmp.ne.s32.totalorder %s76, %s90
      %p92 = scmp.eq.s32.totalorder %s24, 0
      %p93 = por %p91, %p92
      %s95 = sadd.s32 %s94, 1
      %p98 = scmp.eq.s32.totalorder %s18, 1
      %p99 = scmp.ne.s32.totalorder %s94, %s96
      %p100 = scmp.eq.s32.totalorder %s18, 0
      %p101 = por %p99, %p100
      %p102 = scmp.ne.s32.totalorder %s94, %s96
      %p103 = scmp.eq.s32.totalorder %s23, 1
      %p104 = por %p102, %p103
      %p105 = scmp.ne.s32.totalorder %s96, %s97
      %p106 = scmp.eq.s32.totalorder %s23, 0
      %p107 = por %p105, %p106
      %p108 = scmp.ne.s32.totalorder %s96, %s97
      %p109 = scmp.eq.s32.totalorder %s24, 1
      %p110 = por %p108, %p109
      %p112 = scmp.ne.s32.totalorder %s97, %s111
      %p113 = scmp.eq.s32.totalorder %s24, 0
      %p114 = por %p112, %p113
      %s116 = sadd.s32 %s115, 1
      %p119 = scmp.eq.s32.totalorder %s18, 1
      %p120 = scmp.ne.s32.totalorder %s115, %s117
      %p121 = scmp.eq.s32.totalorder %s18, 0
      %p122 = por %p120, %p121
      %p123 = scmp.ne.s32.totalorder %s115, %s117
      %p124 = scmp.eq.s32.totalorder %s23, 1
      %p125 = por %p123, %p124
      %p126 = scmp.ne.s32.totalorder %s117, %s118
      %p127 = scmp.eq.s32.totalorder %s23, 0
      %p128 = por %p126, %p127
      %p129 = scmp.ne.s32.totalorder %s117, %s118
      %p130 = scmp.eq.s32.totalorder %s24, 1
      %p131 = por %p129, %p130
      %p133 = scmp.ne.s32.totalorder %s118, %s132
      %p134 = scmp.eq.s32.totalorder %s24, 0
      %p135 = por %p133, %p134
      %s137 = sadd.s32 %s136, 1
      %p140 = scmp.eq.s32.totalorder %s18, 1
      %p141 = scmp.ne.s32.totalorder %s136, %s138
      %p142 = scmp.eq.s32.totalorder %s18, 0
      %p143 = por %p141, %p142
      %p144 = scmp.ne.s32.totalorder %s136, %s138
      %p145 = scmp.eq.s32.totalorder %s23, 1
      %p146 = por %p144, %p145
      %p147 = scmp.ne.s32.totalorder %s138, %s139
      %p148 = scmp.eq.s32.totalorder %s23, 0
      %p149 = por %p147, %p148
      %p150 = scmp.ne.s32.totalorder %s138, %s139
      %p151 = scmp.eq.s32.totalorder %s24, 1
      %p152 = por %p150, %p151
      %p154 = scmp.ne.s32.totalorder %s139, %s153
      %p155 = scmp.eq.s32.totalorder %s24, 0
      %p156 = por %p154, %p155
      %s158 = sadd.s32 %s157, 1
      %p161 = scmp.eq.s32.totalorder %s18, 1
      %p162 = scmp.ne.s32.totalorder %s157, %s159
      %p163 = scmp.eq.s32.totalorder %s18, 0
      %p164 = por %p162, %p163
      %p165 = scmp.ne.s32.totalorder %s157, %s159
      %p166 = scmp.eq.s32.totalorder %s23, 1
      %p167 = por %p165, %p166
      %p168 = scmp.ne.s32.totalorder %s159, %s160
      %p169 = scmp.eq.s32.totalorder %s23, 0
      %p170 = por %p168, %p169
      %p171 = scmp.ne.s32.totalorder %s159, %s160
      %p172 = scmp.eq.s32.totalorder %s24, 1
      %p173 = por %p171, %p172
      %p175 = scmp.ne.s32.totalorder %s160, %s174
      %p176 = scmp.eq.s32.totalorder %s24, 0
      %p177 = por %p175, %p176
      %s178 = ssub.s32 %s25, %s44
      %s179 = ssub.s32 %s26, %s40
      %s180 = sor.u32 %s178, %s179
      %p181 = scmp.eq.s32.totalorder %s180, 0
      %s183 = sadd.s32 %s182, 1
      %s184 = scalar_select %p181, %s182, %s183
      %p187 = pneg %p181
      %p188 = scmp.eq.s32.totalorder %s18, 1
      %p189 = por %p187, %p188
      %p190 = scmp.ne.s32.totalorder %s182, %s185
      %p191 = scmp.eq.s32.totalorder %s18, 0
      %p192 = por %p190, %p191
      %p193 = scmp.ne.s32.totalorder %s182, %s185
      %p194 = scmp.eq.s32.totalorder %s23, 1
      %p195 = por %p193, %p194
      %p196 = scmp.ne.s32.totalorder %s185, %s186
      %p197 = scmp.eq.s32.totalorder %s23, 0
      %p198 = por %p196, %p197
      %p199 = scmp.ne.s32.totalorder %s185, %s186
      %p200 = scmp.eq.s32.totalorder %s24, 1
      %p201 = por %p199, %p200
      %p203 = scmp.ne.s32.totalorder %s186, %s202
      %p204 = scmp.eq.s32.totalorder %s24, 0
      %p205 = por %p203, %p204
      %p206 = scmp.le.s32.totalorder 1, %s18
      %p207 = scmp.lt.s32.totalorder %s18, 3
      %p208 = pnand %p206, %p207
      %p209 = pneg %p208
      // Predicated region
      $region9: #{tpu_custom_call.1} parent=5 // pred_check
        _
      $region10: #{tpu_custom_call.1} parent=5 // pred_check_branch
        %211 = sbr.rel (%p208) target = $region12
      $region11: #{tpu_custom_call.1} parent=5 // pred_region
        %s212 = ssub.s32 %s18, 1
        // Predicated region
        $region13: #{tpu_custom_call.1} parent=11 // pred_check
          %p213 = pneg %p65
        $region14: #{tpu_custom_call.1} parent=11 // pred_check_branch
          %215 = sbr.rel (%p213) target = $region16
        $region15: #{tpu_custom_call.1} parent=11 // pred_region
          %s216 = smul.u32 16, %s29
          %s218 = ssub.s32 1024, 1024
          %219 = vsyncadd [#allocation6], %s218
          %s220 = sadd.s32 %s30, %s216
          %s221 = smul.addr %s220, 64
          %s222 = scalar_lea.hbm %s0, %s221
          %s223 = sshll.u32 [#allocation5], 4
          %s224 = int_to_ptr.vmem [resolvable:$true] %s223
          %229 = dma.hbm_to_vmem [thread:$0]  %s222, 1024, %s224, [#allocation6], 64, 64, 4
        $region16: #{tpu_custom_call.1} parent=11 // pred_fallthru
          _
        // Predicated region
        $region17: #{tpu_custom_call.1} parent=11 // pred_check
          %p230 = pneg %p86
        $region18: #{tpu_custom_call.1} parent=11 // pred_check_branch
          %232 = sbr.rel (%p230) target = $region20
        $region19: #{tpu_custom_call.1} parent=11 // pred_region
          %s234 = ssub.s32 2048, 2048
          %235 = vsyncadd [#allocation9], %s234
          %s236 = sshll.u32 [#allocation8], 4
          %s237 = int_to_ptr.vmem [resolvable:$true] %s236
          %242 = dma.hbm_to_vmem [thread:$0]  %s1, 2048, %s237, [#allocation9], 128, 128, 8
        $region20: #{tpu_custom_call.1} parent=11 // pred_fallthru
          _
        // Predicated region
        $region21: #{tpu_custom_call.1} parent=11 // pred_check
          %p243 = pneg %p107
        $region22: #{tpu_custom_call.1} parent=11 // pred_check_branch
          %245 = sbr.rel (%p243) target = $region24
        $region23: #{tpu_custom_call.1} parent=11 // pred_region
          %s247 = ssub.s32 4096, 4096
          %248 = vsyncadd [#allocation9], %s247
          %s249 = sshll.u32 [#allocation10], 4
          %s250 = int_to_ptr.vmem [resolvable:$true] %s249
          %255 = dma.hbm_to_vmem [thread:$0]  %s2, 4096, %s250, [#allocation9], 128, 128, 8
        $region24: #{tpu_custom_call.1} parent=11 // pred_fallthru
          _
        // Predicated region
        $region25: #{tpu_custom_call.1} parent=11 // pred_check
          %p256 = pneg %p128
        $region26: #{tpu_custom_call.1} parent=11 // pred_check_branch
          %258 = sbr.rel (%p256) target = $region28
        $region27: #{tpu_custom_call.1} parent=11 // pred_region
          _
        $region28: #{tpu_custom_call.1} parent=11 // pred_fallthru
          _
        // Predicated region
        $region29: #{tpu_custom_call.1} parent=11 // pred_check
          %p259 = pneg %p149
        $region30: #{tpu_custom_call.1} parent=11 // pred_check_branch
          %261 = sbr.rel (%p259) target = $region32
        $region31: #{tpu_custom_call.1} parent=11 // pred_region
          %s263 = ssub.s32 2048, 2048
          %264 = vsyncadd [#allocation12], %s263
          %s265 = sshll.u32 [#allocation11], 4
          %s266 = int_to_ptr.vmem [resolvable:$true] %s265
          %271 = dma.hbm_to_vmem [thread:$0]  %s4, 2048, %s266, [#allocation12], 128, 128, 8
        $region32: #{tpu_custom_call.1} parent=11 // pred_fallthru
          _
        // Predicated region
        $region33: #{tpu_custom_call.1} parent=11 // pred_check
          %p272 = pneg %p170
        $region34: #{tpu_custom_call.1} parent=11 // pred_check_branch
          %274 = sbr.rel (%p272) target = $region36
        $region35: #{tpu_custom_call.1} parent=11 // pred_region
          _
        $region36: #{tpu_custom_call.1} parent=11 // pred_fallthru
          _
      $region12: #{tpu_custom_call.1} parent=5 // pred_fallthru
        _
      %p275 = scmp.lt.s32.totalorder %s18, 2
      // Predicated region
      $region37: #{tpu_custom_call.1} parent=5 // pred_check
        %p276 = pneg %p275
      $region38: #{tpu_custom_call.1} parent=5 // pred_check_branch
        %278 = sbr.rel (%p276) target = $region40
      $region39: #{tpu_custom_call.1} parent=5 // pred_region
        _
      $region40: #{tpu_custom_call.1} parent=5 // pred_fallthru
        _
      %p279 = scmp.le.s32.totalorder 1, %s18
      %p280 = scmp.lt.s32.totalorder %s18, 3
      %p281 = pnand %p279, %p280
      %p282 = pneg %p281
      // Predicated region
      $region41: #{tpu_custom_call.1} parent=5 // pred_check
        _
      $region42: #{tpu_custom_call.1} parent=5 // pred_check_branch
        %284 = sbr.rel (%p281) target = $region44
      $region43: #{tpu_custom_call.1} parent=5 // pred_region
        %s285 = ssub.s32 %s18, 1
        // Predicated region
        $region45: #{tpu_custom_call.1} parent=43 // pred_check
          %p286 = pneg %p65
        $region46: #{tpu_custom_call.1} parent=43 // pred_check_branch
          %288 = sbr.rel (%p286) target = $region48
        $region47: #{tpu_custom_call.1} parent=43 // pred_region
          %289 = dma.done [#allocation6], 1024
        $region48: #{tpu_custom_call.1} parent=43 // pred_fallthru
          _
        // Predicated region
        $region49: #{tpu_custom_call.1} parent=43 // pred_check
          %p290 = pneg %p86
        $region50: #{tpu_custom_call.1} parent=43 // pred_check_branch
          %292 = sbr.rel (%p290) target = $region52
        $region51: #{tpu_custom_call.1} parent=43 // pred_region
          %293 = dma.done [#allocation9], 2048
        $region52: #{tpu_custom_call.1} parent=43 // pred_fallthru
          _
        // Predicated region
        $region53: #{tpu_custom_call.1} parent=43 // pred_check
          %p294 = pneg %p107
        $region54: #{tpu_custom_call.1} parent=43 // pred_check_branch
          %296 = sbr.rel (%p294) target = $region56
        $region55: #{tpu_custom_call.1} parent=43 // pred_region
          %297 = dma.done [#allocation9], 4096
        $region56: #{tpu_custom_call.1} parent=43 // pred_fallthru
          _
        // Predicated region
        $region57: #{tpu_custom_call.1} parent=43 // pred_check
          %p298 = pneg %p149
        $region58: #{tpu_custom_call.1} parent=43 // pred_check_branch
          %300 = sbr.rel (%p298) target = $region60
        $region59: #{tpu_custom_call.1} parent=43 // pred_region
          %301 = dma.done [#allocation12], 2048
        $region60: #{tpu_custom_call.1} parent=43 // pred_fallthru
          _
        %p302 = pneg %p65
        %p303 = pneg %p62
        %p304 = pneg %p86
        %p305 = pneg %p83
        %p306 = pneg %p107
        %p307 = pneg %p104
        %p308 = pneg %p128
        %p309 = pneg %p125
        %p310 = pneg %p149
        %p311 = pneg %p146
        %p312 = pneg %p170
        %p313 = pneg %p167
        %p314 = pneg %p198
        %p315 = pneg %p195
        %s316 = sand.u32 %s185, 1
        %s317 = scalar_lea.sflag [#allocation7], %s316
        %s318 = sand.u32 %s185, 1
        %s319 = smul.addr %s318, 128
        %s320 = scalar_lea.vmem [#allocation13], %s319
        %s321 = smul.u32 16, %s29
        %s322 = smul.u32 16, %s29
        %p324 = scmp.eq.s32.totalorder %s28, 0
        %p325 = scmp.eq.s32.totalorder %s29, 0
        %p326 = pnand %p324, %p325
        %p327 = pneg %p326
        %p328 = scmp.eq.s32.totalorder %s30, 0
        %p329 = pnand %p327, %p328
        %p330 = pneg %p329
        // Predicated region
        $region61: #{tpu_custom_call.1} parent=43 // pred_check
          _
        $region62: #{tpu_custom_call.1} parent=43 // pred_check_branch
          %332 = sbr.rel (%p329) target = $region64
        $region63: #{tpu_custom_call.1} parent=43 // pred_region
          %v333 = vld [vmem:[#allocation8] sm:$0xff]
          %v334 = vld [vmem:[#allocation8 + $0x8] sm:$0xff]
          %v335 = vld [vmem:[#allocation8 + $0x10] sm:$0xff]
          %v336 = vld [vmem:[#allocation8 + $0x18] sm:$0xff]
          %v337 = vld [vmem:[#allocation8 + $0x20] sm:$0xff]
          %v338 = vld [vmem:[#allocation8 + $0x28] sm:$0xff]
          %v339 = vld [vmem:[#allocation8 + $0x30] sm:$0xff]
          %v340 = vld [vmem:[#allocation8 + $0x38] sm:$0xff]
          %v341 = vld [vmem:[#allocation8 + $0x40] sm:$0xff]
          %v342 = vld [vmem:[#allocation8 + $0x48] sm:$0xff]
          %v343 = vld [vmem:[#allocation8 + $0x50] sm:$0xff]
          %v344 = vld [vmem:[#allocation8 + $0x58] sm:$0xff]
          %v345 = vld [vmem:[#allocation8 + $0x60] sm:$0xff]
          %v346 = vld [vmem:[#allocation8 + $0x68] sm:$0xff]
          %v347 = vld [vmem:[#allocation8 + $0x70] sm:$0xff]
          %v348 = vld [vmem:[#allocation8 + $0x78] sm:$0xff]
          %349 = vst [vmem:[#allocation2] sm:$0xff] %v333
          %350 = vst [vmem:[#allocation2 + $0x8] sm:$0xff] %v334
          %351 = vst [vmem:[#allocation2 + $0x10] sm:$0xff] %v335
          %352 = vst [vmem:[#allocation2 + $0x18] sm:$0xff] %v336
          %353 = vst [vmem:[#allocation2 + $0x20] sm:$0xff] %v337
          %354 = vst [vmem:[#allocation2 + $0x28] sm:$0xff] %v338
          %355 = vst [vmem:[#allocation2 + $0x30] sm:$0xff] %v339
          %356 = vst [vmem:[#allocation2 + $0x38] sm:$0xff] %v340
          %357 = vst [vmem:[#allocation2 + $0x40] sm:$0xff] %v341
          %358 = vst [vmem:[#allocation2 + $0x48] sm:$0xff] %v342
          %359 = vst [vmem:[#allocation2 + $0x50] sm:$0xff] %v343
          %360 = vst [vmem:[#allocation2 + $0x58] sm:$0xff] %v344
          %361 = vst [vmem:[#allocation2 + $0x60] sm:$0xff] %v345
          %362 = vst [vmem:[#allocation2 + $0x68] sm:$0xff] %v346
          %363 = vst [vmem:[#allocation2 + $0x70] sm:$0xff] %v347
          %364 = vst [vmem:[#allocation2 + $0x78] sm:$0xff] %v348
        $region64: #{tpu_custom_call.1} parent=43 // pred_fallthru
          _
        %p365 = pnand %p325, %p328
        %p366 = pneg %p365
        // Predicated region
        $region65: #{tpu_custom_call.1} parent=43 // pred_check
          _
        $region66: #{tpu_custom_call.1} parent=43 // pred_check_branch
          %368 = sbr.rel (%p365) target = $region68
        $region67: #{tpu_custom_call.1} parent=43 // pred_region
          %v369 = vld [vmem:[#allocation2] sm:$0xff]
          %v370 = vld [vmem:[#allocation2 + $0x8] sm:$0xff]
          %v371 = vld [vmem:[#allocation2 + $0x10] sm:$0xff]
          %v372 = vld [vmem:[#allocation2 + $0x18] sm:$0xff]
          %v373 = vld [vmem:[#allocation2 + $0x20] sm:$0xff]
          %v374 = vld [vmem:[#allocation2 + $0x28] sm:$0xff]
          %v375 = vld [vmem:[#allocation2 + $0x30] sm:$0xff]
          %v376 = vld [vmem:[#allocation2 + $0x38] sm:$0xff]
          %v377 = vld [vmem:[#allocation2 + $0x40] sm:$0xff]
          %v378 = vld [vmem:[#allocation2 + $0x48] sm:$0xff]
          %v379 = vld [vmem:[#allocation2 + $0x50] sm:$0xff]
          %v380 = vld [vmem:[#allocation2 + $0x58] sm:$0xff]
          %v381 = vld [vmem:[#allocation2 + $0x60] sm:$0xff]
          %v382 = vld [vmem:[#allocation2 + $0x68] sm:$0xff]
          %v383 = vld [vmem:[#allocation2 + $0x70] sm:$0xff]
          %v384 = vld [vmem:[#allocation2 + $0x78] sm:$0xff]
          %s385 = smul.u32 %s28, 128
          %s386 = scalar_lea.vmem [#allocation10], %s385
          %v387 = vld [vmem:[%s386] sm:$0xff]
          %v388 = vld [vmem:[%s386 + $0x8] sm:$0xff]
          %v389 = vld [vmem:[%s386 + $0x10] sm:$0xff]
          %v390 = vld [vmem:[%s386 + $0x18] sm:$0xff]
          %v391 = vld [vmem:[%s386 + $0x20] sm:$0xff]
          %v392 = vld [vmem:[%s386 + $0x28] sm:$0xff]
          %v393 = vld [vmem:[%s386 + $0x30] sm:$0xff]
          %v394 = vld [vmem:[%s386 + $0x38] sm:$0xff]
          %v395 = vld [vmem:[%s386 + $0x40] sm:$0xff]
          %v396 = vld [vmem:[%s386 + $0x48] sm:$0xff]
          %v397 = vld [vmem:[%s386 + $0x50] sm:$0xff]
          %v398 = vld [vmem:[%s386 + $0x58] sm:$0xff]
          %v399 = vld [vmem:[%s386 + $0x60] sm:$0xff]
          %v400 = vld [vmem:[%s386 + $0x68] sm:$0xff]
          %v401 = vld [vmem:[%s386 + $0x70] sm:$0xff]
          %v402 = vld [vmem:[%s386 + $0x78] sm:$0xff]
          %403 = vmatprep.subr.mxu0 0.0
          %404 = vmatpush1.msra.mxu0 %v387
          %405 = vmatprep.subr.mxu0 0.0
          %406 = vmatpush1.msra.mxu0 %v388
          %407 = vmatprep.subr.mxu0 0.0
          %408 = vmatpush1.msra.mxu0 %v389
          %409 = vmatprep.subr.mxu0 0.0
          %410 = vmatpush1.msra.mxu0 %v390
          %411 = vmatprep.subr.mxu0 0.0
          %412 = vmatpush1.msra.mxu0 %v391
          %413 = vmatprep.subr.mxu0 0.0
          %414 = vmatpush1.msra.mxu0 %v392
          %415 = vmatprep.subr.mxu0 0.0
          %416 = vmatpush1.msra.mxu0 %v393
          %417 = vmatprep.subr.mxu0 0.0
          %418 = vmatpush1.msra.mxu0 %v394
          %419 = vmatprep.subr.mxu0 0.0
          %420 = vmatpush1.msra.mxu0 %v395
          %421 = vmatprep.subr.mxu0 0.0
          %422 = vmatpush1.msra.mxu0 %v396
          %423 = vmatprep.subr.mxu0 0.0
          %424 = vmatpush1.msra.mxu0 %v397
          %425 = vmatprep.subr.mxu0 0.0
          %426 = vmatpush1.msra.mxu0 %v398
          %427 = vmatprep.subr.mxu0 0.0
          %428 = vmatpush1.msra.mxu0 %v399
          %429 = vmatprep.subr.mxu0 0.0
          %430 = vmatpush1.msra.mxu0 %v400
          %431 = vmatprep.subr.mxu0 0.0
          %432 = vmatpush1.msra.mxu0 %v401
          %433 = vmatprep.subr.mxu0 0.0
          %434 = vmatpush1.msra.mxu0 %v402
          %435 = vmatprep.subr.mxu0 0.0
          %436 = vmatpush1.msra.mxu0 0.0
          %437 = vmatprep.subr.mxu0 0.0
          %438 = vmatpush1.msra.mxu0 0.0
          %439 = vmatprep.subr.mxu0 0.0
          %440 = vmatpush1.msra.mxu0 0.0
          %441 = vmatprep.subr.mxu0 0.0
          %442 = vmatpush1.msra.mxu0 0.0
          %443 = vmatprep.subr.mxu0 0.0
          %444 = vmatpush1.msra.mxu0 0.0
          %445 = vmatprep.subr.mxu0 0.0
          %446 = vmatpush1.msra.mxu0 0.0
          %447 = vmatprep.subr.mxu0 0.0
          %448 = vmatpush1.msra.mxu0 0.0
          %449 = vmatprep.subr.mxu0 0.0
          %450 = vmatpush1.msra.mxu0 0.0
          %451 = vmatprep.subr.mxu0 0.0
          %452 = vmatpush1.msra.mxu0 0.0
          %453 = vmatprep.subr.mxu0 0.0
          %454 = vmatpush1.msra.mxu0 0.0
          %455 = vmatprep.subr.mxu0 0.0
          %456 = vmatpush1.msra.mxu0 0.0
          %457 = vmatprep.subr.mxu0 0.0
          %458 = vmatpush1.msra.mxu0 0.0
          %459 = vmatprep.subr.mxu0 0.0
          %460 = vmatpush1.msra.mxu0 0.0
          %461 = vmatprep.subr.mxu0 0.0
          %462 = vmatpush1.msra.mxu0 0.0
          %463 = vmatprep.subr.mxu0 0.0
          %464 = vmatpush1.msra.mxu0 0.0
          %465 = vmatprep.subr.mxu0 0.0
          %466 = vmatpush1.msra.mxu0 0.0
          %467 = vmatprep.mubr.f32.mxu0 0.0
          %468 = vmatmul.mubr.f32.gmra.mrb[0].mxu0 %v369
          %v469 = vpop.f32.mrb[0].mxu0
          %v470 = vadd.f32 0.0, %v469
          %v471 = vpop.f32.mrb[0].mxu0
          %472 = vmatprep.mubr.f32.mxu0 0.0
          %473 = vmatmul.mubr.f32.gmra.mrb[0].mxu0 %v370
          %v474 = vpop.f32.mrb[0].mxu0
          %v475 = vadd.f32 0.0, %v474
          %v476 = vpop.f32.mrb[0].mxu0
          %477 = vmatprep.mubr.f32.mxu0 0.0
          %478 = vmatmul.mubr.f32.gmra.mrb[0].mxu0 %v371
          %v479 = vpop.f32.mrb[0].mxu0
          %v480 = vadd.f32 0.0, %v479
          %v481 = vpop.f32.mrb[0].mxu0
          %482 = vmatprep.mubr.f32.mxu0 0.0
          %483 = vmatmul.mubr.f32.gmra.mrb[0].mxu0 %v372
          %v484 = vpop.f32.mrb[0].mxu0
          %v485 = vadd.f32 0.0, %v484
          %v486 = vpop.f32.mrb[0].mxu0
          %487 = vmatprep.mubr.f32.mxu0 0.0
          %488 = vmatmul.mubr.f32.gmra.mrb[0].mxu0 %v373
          %v489 = vpop.f32.mrb[0].mxu0
          %v490 = vadd.f32 0.0, %v489
          %v491 = vpop.f32.mrb[0].mxu0
          %492 = vmatprep.mubr.f32.mxu0 0.0
          %493 = vmatmul.mubr.f32.gmra.mrb[0].mxu0 %v374
          %v494 = vpop.f32.mrb[0].mxu0
          %v495 = vadd.f32 0.0, %v494
          %v496 = vpop.f32.mrb[0].mxu0
          %497 = vmatprep.mubr.f32.mxu0 0.0
          %498 = vmatmul.mubr.f32.gmra.mrb[0].mxu0 %v375
          %v499 = vpop.f32.mrb[0].mxu0
          %v500 = vadd.f32 0.0, %v499
          %v501 = vpop.f32.mrb[0].mxu0
          %502 = vmatprep.mubr.f32.mxu0 0.0
          %503 = vmatmul.mubr.f32.gmra.mrb[0].mxu0 %v376
          %v504 = vpop.f32.mrb[0].mxu0
          %v505 = vadd.f32 0.0, %v504
          %v506 = vpop.f32.mrb[0].mxu0
          %507 = vmatprep.mubr.f32.mxu0 0.0
          %508 = vmatmul.mubr.f32.gmra.mrb[0].mxu0 %v377
          %v509 = vpop.f32.mrb[0].mxu0
          %v510 = vadd.f32 0.0, %v509
          %v511 = vpop.f32.mrb[0].mxu0
          %512 = vmatprep.mubr.f32.mxu0 0.0
          %513 = vmatmul.mubr.f32.gmra.mrb[0].mxu0 %v378
          %v514 = vpop.f32.mrb[0].mxu0
          %v515 = vadd.f32 0.0, %v514
          %v516 = vpop.f32.mrb[0].mxu0
          %517 = vmatprep.mubr.f32.mxu0 0.0
          %518 = vmatmul.mubr.f32.gmra.mrb[0].mxu0 %v379
          %v519 = vpop.f32.mrb[0].mxu0
          %v520 = vadd.f32 0.0, %v519
          %v521 = vpop.f32.mrb[0].mxu0
          %522 = vmatprep.mubr.f32.mxu0 0.0
          %523 = vmatmul.mubr.f32.gmra.mrb[0].mxu0 %v380
          %v524 = vpop.f32.mrb[0].mxu0
          %v525 = vadd.f32 0.0, %v524
          %v526 = vpop.f32.mrb[0].mxu0
          %527 = vmatprep.mubr.f32.mxu0 0.0
          %528 = vmatmul.mubr.f32.gmra.mrb[0].mxu0 %v381
          %v529 = vpop.f32.mrb[0].mxu0
          %v530 = vadd.f32 0.0, %v529
          %v531 = vpop.f32.mrb[0].mxu0
          %532 = vmatprep.mubr.f32.mxu0 0.0
          %533 = vmatmul.mubr.f32.gmra.mrb[0].mxu0 %v382
          %v534 = vpop.f32.mrb[0].mxu0
          %v535 = vadd.f32 0.0, %v534
          %v536 = vpop.f32.mrb[0].mxu0
          %537 = vmatprep.mubr.f32.mxu0 0.0
          %538 = vmatmul.mubr.f32.gmra.mrb[0].mxu0 %v383
          %v539 = vpop.f32.mrb[0].mxu0
          %v540 = vadd.f32 0.0, %v539
          %v541 = vpop.f32.mrb[0].mxu0
          %542 = vmatprep.mubr.f32.mxu0 0.0
          %543 = vmatmul.mubr.f32.gmra.mrb[0].mxu0 %v384
          %v544 = vpop.f32.mrb[0].mxu0
          %v545 = vadd.f32 0.0, %v544
          %v546 = vpop.f32.mrb[0].mxu0
          %547 = vdwg.mxu0
          %548 = vst [vmem:[#allocation3] sm:$0xff] %v470
          %549 = vst [vmem:[#allocation3 + $0x8] sm:$0xff] %v475
          %550 = vst [vmem:[#allocation3 + $0x10] sm:$0xff] %v480
          %551 = vst [vmem:[#allocation3 + $0x18] sm:$0xff] %v485
          %552 = vst [vmem:[#allocation3 + $0x20] sm:$0xff] %v490
          %553 = vst [vmem:[#allocation3 + $0x28] sm:$0xff] %v495
          %554 = vst [vmem:[#allocation3 + $0x30] sm:$0xff] %v500
          %555 = vst [vmem:[#allocation3 + $0x38] sm:$0xff] %v505
          %556 = vst [vmem:[#allocation3 + $0x40] sm:$0xff] %v510
          %557 = vst [vmem:[#allocation3 + $0x48] sm:$0xff] %v515
          %558 = vst [vmem:[#allocation3 + $0x50] sm:$0xff] %v520
          %559 = vst [vmem:[#allocation3 + $0x58] sm:$0xff] %v525
          %560 = vst [vmem:[#allocation3 + $0x60] sm:$0xff] %v530
          %561 = vst [vmem:[#allocation3 + $0x68] sm:$0xff] %v535
          %562 = vst [vmem:[#allocation3 + $0x70] sm:$0xff] %v540
          %563 = vst [vmem:[#allocation3 + $0x78] sm:$0xff] %v545
        $region68: #{tpu_custom_call.1} parent=43 // pred_fallthru
          _
        // Predicated region
        $region69: #{tpu_custom_call.1} parent=43 // pred_check
          %p564 = pneg %p328
        $region70: #{tpu_custom_call.1} parent=43 // pred_check_branch
          %566 = sbr.rel (%p564) target = $region72
        $region71: #{tpu_custom_call.1} parent=43 // pred_region
          %567 = vst [vmem:[#allocation4] sm:$0xff] 0.0
          %568 = vst [vmem:[#allocation4 + $0x8] sm:$0xff] 0.0
          %569 = vst [vmem:[#allocation4 + $0x10] sm:$0xff] 0.0
          %570 = vst [vmem:[#allocation4 + $0x18] sm:$0xff] 0.0
          %571 = vst [vmem:[#allocation4 + $0x20] sm:$0xff] 0.0
          %572 = vst [vmem:[#allocation4 + $0x28] sm:$0xff] 0.0
          %573 = vst [vmem:[#allocation4 + $0x30] sm:$0xff] 0.0
          %574 = vst [vmem:[#allocation4 + $0x38] sm:$0xff] 0.0
          %575 = vst [vmem:[#allocation4 + $0x40] sm:$0xff] 0.0
          %576 = vst [vmem:[#allocation4 + $0x48] sm:$0xff] 0.0
          %577 = vst [vmem:[#allocation4 + $0x50] sm:$0xff] 0.0
          %578 = vst [vmem:[#allocation4 + $0x58] sm:$0xff] 0.0
          %579 = vst [vmem:[#allocation4 + $0x60] sm:$0xff] 0.0
          %580 = vst [vmem:[#allocation4 + $0x68] sm:$0xff] 0.0
          %581 = vst [vmem:[#allocation4 + $0x70] sm:$0xff] 0.0
          %582 = vst [vmem:[#allocation4 + $0x78] sm:$0xff] 0.0
        $region72: #{tpu_custom_call.1} parent=43 // pred_fallthru
          _
        %s583 = smul.u32 %s30, 128
        %s584 = scalar_lea.vmem [#allocation3], %s583
        %v585 = vld [vmem:[%s584] sm:$0xff]
        %v586 = vld [vmem:[%s584 + $0x8] sm:$0xff]
        %v587 = vld [vmem:[%s584 + $0x10] sm:$0xff]
        %v588 = vld [vmem:[%s584 + $0x18] sm:$0xff]
        %v589 = vld [vmem:[%s584 + $0x20] sm:$0xff]
        %v590 = vld [vmem:[%s584 + $0x28] sm:$0xff]
        %v591 = vld [vmem:[%s584 + $0x30] sm:$0xff]
        %v592 = vld [vmem:[%s584 + $0x38] sm:$0xff]
        %v593 = vld [vmem:[%s584 + $0x40] sm:$0xff]
        %v594 = vld [vmem:[%s584 + $0x48] sm:$0xff]
        %v595 = vld [vmem:[%s584 + $0x50] sm:$0xff]
        %v596 = vld [vmem:[%s584 + $0x58] sm:$0xff]
        %v597 = vld [vmem:[%s584 + $0x60] sm:$0xff]
        %v598 = vld [vmem:[%s584 + $0x68] sm:$0xff]
        %v599 = vld [vmem:[%s584 + $0x70] sm:$0xff]
        %v600 = vld [vmem:[%s584 + $0x78] sm:$0xff]
        %v601 = vpack.c.bf16 %v586, %v585
        %v602 = vpack.c.bf16 %v588, %v587
        %v603 = vpack.c.bf16 %v590, %v589
        %v604 = vpack.c.bf16 %v592, %v591
        %v605 = vpack.c.bf16 %v594, %v593
        %v606 = vpack.c.bf16 %v596, %v595
        %v607 = vpack.c.bf16 %v598, %v597
        %v608 = vpack.c.bf16 %v600, %v599
        %v609 = vld [vmem:[#allocation4] sm:$0xff]
        %v610 = vld [vmem:[#allocation4 + $0x8] sm:$0xff]
        %v611 = vld [vmem:[#allocation4 + $0x10] sm:$0xff]
        %v612 = vld [vmem:[#allocation4 + $0x18] sm:$0xff]
        %v613 = vld [vmem:[#allocation4 + $0x20] sm:$0xff]
        %v614 = vld [vmem:[#allocation4 + $0x28] sm:$0xff]
        %v615 = vld [vmem:[#allocation4 + $0x30] sm:$0xff]
        %v616 = vld [vmem:[#allocation4 + $0x38] sm:$0xff]
        %v617 = vld [vmem:[#allocation4 + $0x40] sm:$0xff]
        %v618 = vld [vmem:[#allocation4 + $0x48] sm:$0xff]
        %v619 = vld [vmem:[#allocation4 + $0x50] sm:$0xff]
        %v620 = vld [vmem:[#allocation4 + $0x58] sm:$0xff]
        %v621 = vld [vmem:[#allocation4 + $0x60] sm:$0xff]
        %v622 = vld [vmem:[#allocation4 + $0x68] sm:$0xff]
        %v623 = vld [vmem:[#allocation4 + $0x70] sm:$0xff]
        %v624 = vld [vmem:[#allocation4 + $0x78] sm:$0xff]
        %v625 = vld [vmem:[#allocation5] sm:$0xf]
        %v626 = vld [vmem:[#allocation5 + $0x4] sm:$0xf]
        %v627 = vld [vmem:[#allocation5 + $0x8] sm:$0xf]
        %v628 = vld [vmem:[#allocation5 + $0xc] sm:$0xf]
        %v629 = vld [vmem:[#allocation5 + $0x10] sm:$0xf]
        %v630 = vld [vmem:[#allocation5 + $0x14] sm:$0xf]
        %v631 = vld [vmem:[#allocation5 + $0x18] sm:$0xf]
        %v632 = vld [vmem:[#allocation5 + $0x1c] sm:$0xf]
        %v633 = vld [vmem:[#allocation5 + $0x20] sm:$0xf]
        %v634 = vld [vmem:[#allocation5 + $0x24] sm:$0xf]
        %v635 = vld [vmem:[#allocation5 + $0x28] sm:$0xf]
        %v636 = vld [vmem:[#allocation5 + $0x2c] sm:$0xf]
        %v637 = vld [vmem:[#allocation5 + $0x30] sm:$0xf]
        %v638 = vld [vmem:[#allocation5 + $0x34] sm:$0xf]
        %v639 = vld [vmem:[#allocation5 + $0x38] sm:$0xf]
        %v640 = vld [vmem:[#allocation5 + $0x3c] sm:$0xf]
        %v657 = vunpack.c.l.b16 %v625
        %v658 = vunpack.c.l.b16 %v626
        %v659 = vunpack.c.l.b16 %v627
        %v660 = vunpack.c.l.b16 %v628
        %v661 = vunpack.c.l.b16 %v629
        %v662 = vunpack.c.l.b16 %v630
        %v663 = vunpack.c.l.b16 %v631
        %v664 = vunpack.c.l.b16 %v632
        %v665 = vunpack.c.l.b16 %v633
        %v666 = vunpack.c.l.b16 %v634
        %v667 = vunpack.c.l.b16 %v635
        %v668 = vunpack.c.l.b16 %v636
        %v669 = vunpack.c.l.b16 %v637
        %v670 = vunpack.c.l.b16 %v638
        %v671 = vunpack.c.l.b16 %v639
        %v672 = vunpack.c.l.b16 %v640
        %v673 = vpack.c.b16 %v658, %v657
        %v674 = vpack.c.b16 %v660, %v659
        %v675 = vpack.c.b16 %v662, %v661
        %v676 = vpack.c.b16 %v664, %v663
        %v677 = vpack.c.b16 %v666, %v665
        %v678 = vpack.c.b16 %v668, %v667
        %v679 = vpack.c.b16 %v670, %v669
        %v680 = vpack.c.b16 %v672, %v671
        %689 = vmatprep.subr.bf16.mxu0 0
        %690 = vmatpush1.bf16.msra.mxu0 %v601
        %691 = vmatprep.subr.bf16.mxu0 0
        %692 = vmatpush1.bf16.msra.mxu0 %v602
        %693 = vmatprep.subr.bf16.mxu0 0
        %694 = vmatpush1.bf16.msra.mxu0 %v603
        %695 = vmatprep.subr.bf16.mxu0 0
        %696 = vmatpush1.bf16.msra.mxu0 %v604
        %697 = vmatprep.subr.bf16.mxu0 0
        %698 = vmatpush1.bf16.msra.mxu0 %v605
        %699 = vmatprep.subr.bf16.mxu0 0
        %700 = vmatpush1.bf16.msra.mxu0 %v606
        %701 = vmatprep.subr.bf16.mxu0 0
        %702 = vmatpush1.bf16.msra.mxu0 %v607
        %703 = vmatprep.subr.bf16.mxu0 0
        %704 = vmatpush1.bf16.msra.mxu0 %v608
        %705 = vmatprep.subr.bf16.mxu0 0
        %706 = vmatpush1.bf16.msra.mxu0 0
        %707 = vmatprep.subr.bf16.mxu0 0
        %708 = vmatpush1.bf16.msra.mxu0 0
        %709 = vmatprep.subr.bf16.mxu0 0
        %710 = vmatpush1.bf16.msra.mxu0 0
        %711 = vmatprep.subr.bf16.mxu0 0
        %712 = vmatpush1.bf16.msra.mxu0 0
        %713 = vmatprep.subr.bf16.mxu0 0
        %714 = vmatpush1.bf16.msra.mxu0 0
        %715 = vmatprep.subr.bf16.mxu0 0
        %716 = vmatpush1.bf16.msra.mxu0 0
        %717 = vmatprep.subr.bf16.mxu0 0
        %718 = vmatpush1.bf16.msra.mxu0 0
        %719 = vmatprep.subr.bf16.mxu0 0
        %720 = vmatpush1.bf16.msra.mxu0 0
        %721 = vmatprep.mubr.bf16.mxu0 0
        %722 = vmatmul.mubr.bf16.gmra.mrb[0].mxu0 %v673
        %v723 = vpop.f32.mrb[0].mxu0
        %v724 = vadd.f32 0.0, %v723
        %v725 = vpop.f32.mrb[0].mxu0
        %v726 = vpop.f32.mrb[0].mxu0
        %v727 = vadd.f32 0.0, %v726
        %v728 = vpop.f32.mrb[0].mxu0
        %729 = vmatprep.mubr.bf16.mxu0 0
        %730 = vmatmul.mubr.bf16.gmra.mrb[0].mxu0 %v674
        %v731 = vpop.f32.mrb[0].mxu0
        %v732 = vadd.f32 0.0, %v731
        %v733 = vpop.f32.mrb[0].mxu0
        %v734 = vpop.f32.mrb[0].mxu0
        %v735 = vadd.f32 0.0, %v734
        %v736 = vpop.f32.mrb[0].mxu0
        %737 = vmatprep.mubr.bf16.mxu0 0
        %738 = vmatmul.mubr.bf16.gmra.mrb[0].mxu0 %v675
        %v739 = vpop.f32.mrb[0].mxu0
        %v740 = vadd.f32 0.0, %v739
        %v741 = vpop.f32.mrb[0].mxu0
        %v742 = vpop.f32.mrb[0].mxu0
        %v743 = vadd.f32 0.0, %v742
        %v744 = vpop.f32.mrb[0].mxu0
        %745 = vmatprep.mubr.bf16.mxu0 0
        %746 = vmatmul.mubr.bf16.gmra.mrb[0].mxu0 %v676
        %v747 = vpop.f32.mrb[0].mxu0
        %v748 = vadd.f32 0.0, %v747
        %v749 = vpop.f32.mrb[0].mxu0
        %v750 = vpop.f32.mrb[0].mxu0
        %v751 = vadd.f32 0.0, %v750
        %v752 = vpop.f32.mrb[0].mxu0
        %753 = vmatprep.mubr.bf16.mxu0 0
        %754 = vmatmul.mubr.bf16.gmra.mrb[0].mxu0 %v677
        %v755 = vpop.f32.mrb[0].mxu0
        %v756 = vadd.f32 0.0, %v755
        %v757 = vpop.f32.mrb[0].mxu0
        %v758 = vpop.f32.mrb[0].mxu0
        %v759 = vadd.f32 0.0, %v758
        %v760 = vpop.f32.mrb[0].mxu0
        %761 = vmatprep.mubr.bf16.mxu0 0
        %762 = vmatmul.mubr.bf16.gmra.mrb[0].mxu0 %v678
        %v763 = vpop.f32.mrb[0].mxu0
        %v764 = vadd.f32 0.0, %v763
        %v765 = vpop.f32.mrb[0].mxu0
        %v766 = vpop.f32.mrb[0].mxu0
        %v767 = vadd.f32 0.0, %v766
        %v768 = vpop.f32.mrb[0].mxu0
        %769 = vmatprep.mubr.bf16.mxu0 0
        %770 = vmatmul.mubr.bf16.gmra.mrb[0].mxu0 %v679
        %v771 = vpop.f32.mrb[0].mxu0
        %v772 = vadd.f32 0.0, %v771
        %v773 = vpop.f32.mrb[0].mxu0
        %v774 = vpop.f32.mrb[0].mxu0
        %v775 = vadd.f32 0.0, %v774
        %v776 = vpop.f32.mrb[0].mxu0
        %777 = vmatprep.mubr.bf16.mxu0 0
        %778 = vmatmul.mubr.bf16.gmra.mrb[0].mxu0 %v680
        %v779 = vpop.f32.mrb[0].mxu0
        %v780 = vadd.f32 0.0, %v779
        %v781 = vpop.f32.mrb[0].mxu0
        %v782 = vpop.f32.mrb[0].mxu0
        %v783 = vadd.f32 0.0, %v782
        %v784 = vpop.f32.mrb[0].mxu0
        %785 = vdwg.mxu0
        %v786 = vadd.f32 %v609, %v724
        %v787 = vadd.f32 %v610, %v727
        %v788 = vadd.f32 %v611, %v732
        %v789 = vadd.f32 %v612, %v735
        %v790 = vadd.f32 %v613, %v740
        %v791 = vadd.f32 %v614, %v743
        %v792 = vadd.f32 %v615, %v748
        %v793 = vadd.f32 %v616, %v751
        %v794 = vadd.f32 %v617, %v756
        %v795 = vadd.f32 %v618, %v759
        %v796 = vadd.f32 %v619, %v764
        %v797 = vadd.f32 %v620, %v767
        %v798 = vadd.f32 %v621, %v772
        %v799 = vadd.f32 %v622, %v775
        %v800 = vadd.f32 %v623, %v780
        %v801 = vadd.f32 %v624, %v783
        %802 = vst [vmem:[#allocation4] sm:$0xff] %v786
        %803 = vst [vmem:[#allocation4 + $0x8] sm:$0xff] %v787
        %804 = vst [vmem:[#allocation4 + $0x10] sm:$0xff] %v788
        %805 = vst [vmem:[#allocation4 + $0x18] sm:$0xff] %v789
        %806 = vst [vmem:[#allocation4 + $0x20] sm:$0xff] %v790
        %807 = vst [vmem:[#allocation4 + $0x28] sm:$0xff] %v791
        %808 = vst [vmem:[#allocation4 + $0x30] sm:$0xff] %v792
        %809 = vst [vmem:[#allocation4 + $0x38] sm:$0xff] %v793
        %810 = vst [vmem:[#allocation4 + $0x40] sm:$0xff] %v794
        %811 = vst [vmem:[#allocation4 + $0x48] sm:$0xff] %v795
        %812 = vst [vmem:[#allocation4 + $0x50] sm:$0xff] %v796
        %813 = vst [vmem:[#allocation4 + $0x58] sm:$0xff] %v797
        %814 = vst [vmem:[#allocation4 + $0x60] sm:$0xff] %v798
        %815 = vst [vmem:[#allocation4 + $0x68] sm:$0xff] %v799
        %816 = vst [vmem:[#allocation4 + $0x70] sm:$0xff] %v800
        %817 = vst [vmem:[#allocation4 + $0x78] sm:$0xff] %v801
        %p818 = scmp.lt.s32.totalorder %s28, 1
        %p819 = pnand %p328, %p818
        %p820 = pneg %p819
        // Predicated region
        $region73: #{tpu_custom_call.1} parent=43 // pred_check
          _
        $region74: #{tpu_custom_call.1} parent=43 // pred_check_branch
          %822 = sbr.rel (%p819) target = $region76
        $region75: #{tpu_custom_call.1} parent=43 // pred_region
          %v823 = vld [vmem:[#allocation4] sm:$0xff]
          %v824 = vld [vmem:[#allocation4 + $0x8] sm:$0xff]
          %v825 = vld [vmem:[#allocation4 + $0x10] sm:$0xff]
          %v826 = vld [vmem:[#allocation4 + $0x18] sm:$0xff]
          %v827 = vld [vmem:[#allocation4 + $0x20] sm:$0xff]
          %v828 = vld [vmem:[#allocation4 + $0x28] sm:$0xff]
          %v829 = vld [vmem:[#allocation4 + $0x30] sm:$0xff]
          %v830 = vld [vmem:[#allocation4 + $0x38] sm:$0xff]
          %v831 = vld [vmem:[#allocation4 + $0x40] sm:$0xff]
          %v832 = vld [vmem:[#allocation4 + $0x48] sm:$0xff]
          %v833 = vld [vmem:[#allocation4 + $0x50] sm:$0xff]
          %v834 = vld [vmem:[#allocation4 + $0x58] sm:$0xff]
          %v835 = vld [vmem:[#allocation4 + $0x60] sm:$0xff]
          %v836 = vld [vmem:[#allocation4 + $0x68] sm:$0xff]
          %v837 = vld [vmem:[#allocation4 + $0x70] sm:$0xff]
          %v838 = vld [vmem:[#allocation4 + $0x78] sm:$0xff]
          %s839 = scalar_lea.vmem %s3, %s28
          %v840 = vld [vmem:[%s839] sm:$0x1]
          %v842 = vlaneseq
          %v843 = vshrl.u32 %v842, 7
          %v844 = vsub.s32 0, %v843
          %v845 = vrot.slane %v840, %v844
          %v847 = vadd.f32 %v823, %v845
          %v848 = vadd.f32 %v824, %v845
          %v849 = vadd.f32 %v825, %v845
          %v850 = vadd.f32 %v826, %v845
          %v851 = vadd.f32 %v827, %v845
          %v852 = vadd.f32 %v828, %v845
          %v853 = vadd.f32 %v829, %v845
          %v854 = vadd.f32 %v830, %v845
          %v855 = vadd.f32 %v831, %v845
          %v856 = vadd.f32 %v832, %v845
          %v857 = vadd.f32 %v833, %v845
          %v858 = vadd.f32 %v834, %v845
          %v859 = vadd.f32 %v835, %v845
          %v860 = vadd.f32 %v836, %v845
          %v861 = vadd.f32 %v837, %v845
          %v862 = vadd.f32 %v838, %v845
          %v863 = vmax.f32 %v847, 0.0
          %v864 = vmax.f32 %v848, 0.0
          %v865 = vmax.f32 %v849, 0.0
          %v866 = vmax.f32 %v850, 0.0
          %v867 = vmax.f32 %v851, 0.0
          %v868 = vmax.f32 %v852, 0.0
          %v869 = vmax.f32 %v853, 0.0
          %v870 = vmax.f32 %v854, 0.0
          %v871 = vmax.f32 %v855, 0.0
          %v872 = vmax.f32 %v856, 0.0
          %v873 = vmax.f32 %v857, 0.0
          %v874 = vmax.f32 %v858, 0.0
          %v875 = vmax.f32 %v859, 0.0
          %v876 = vmax.f32 %v860, 0.0
          %v877 = vmax.f32 %v861, 0.0
          %v878 = vmax.f32 %v862, 0.0
          %s879 = smul.u32 %s29, 128
          %s880 = scalar_lea.vmem [#allocation2], %s879
          %881 = vst [vmem:[%s880] sm:$0xff] %v863
          %882 = vst [vmem:[%s880 + $0x8] sm:$0xff] %v864
          %883 = vst [vmem:[%s880 + $0x10] sm:$0xff] %v865
          %884 = vst [vmem:[%s880 + $0x18] sm:$0xff] %v866
          %885 = vst [vmem:[%s880 + $0x20] sm:$0xff] %v867
          %886 = vst [vmem:[%s880 + $0x28] sm:$0xff] %v868
          %887 = vst [vmem:[%s880 + $0x30] sm:$0xff] %v869
          %888 = vst [vmem:[%s880 + $0x38] sm:$0xff] %v870
          %889 = vst [vmem:[%s880 + $0x40] sm:$0xff] %v871
          %890 = vst [vmem:[%s880 + $0x48] sm:$0xff] %v872
          %891 = vst [vmem:[%s880 + $0x50] sm:$0xff] %v873
          %892 = vst [vmem:[%s880 + $0x58] sm:$0xff] %v874
          %893 = vst [vmem:[%s880 + $0x60] sm:$0xff] %v875
          %894 = vst [vmem:[%s880 + $0x68] sm:$0xff] %v876
          %895 = vst [vmem:[%s880 + $0x70] sm:$0xff] %v877
          %896 = vst [vmem:[%s880 + $0x78] sm:$0xff] %v878
        $region76: #{tpu_custom_call.1} parent=43 // pred_fallthru
          _
        %p897 = scmp.eq.s32.totalorder %s28, 1
        %p898 = pnand %p328, %p897
        %p899 = pneg %p898
        // Predicated region
        $region77: #{tpu_custom_call.1} parent=43 // pred_check
          _
        $region78: #{tpu_custom_call.1} parent=43 // pred_check_branch
          %901 = sbr.rel (%p898) target = $region80
        $region79: #{tpu_custom_call.1} parent=43 // pred_region
          %v902 = vld [vmem:[#allocation4] sm:$0xff]
          %v903 = vld [vmem:[#allocation4 + $0x8] sm:$0xff]
          %v904 = vld [vmem:[#allocation4 + $0x10] sm:$0xff]
          %v905 = vld [vmem:[#allocation4 + $0x18] sm:$0xff]
          %v906 = vld [vmem:[#allocation4 + $0x20] sm:$0xff]
          %v907 = vld [vmem:[#allocation4 + $0x28] sm:$0xff]
          %v908 = vld [vmem:[#allocation4 + $0x30] sm:$0xff]
          %v909 = vld [vmem:[#allocation4 + $0x38] sm:$0xff]
          %v910 = vld [vmem:[#allocation4 + $0x40] sm:$0xff]
          %v911 = vld [vmem:[#allocation4 + $0x48] sm:$0xff]
          %v912 = vld [vmem:[#allocation4 + $0x50] sm:$0xff]
          %v913 = vld [vmem:[#allocation4 + $0x58] sm:$0xff]
          %v914 = vld [vmem:[#allocation4 + $0x60] sm:$0xff]
          %v915 = vld [vmem:[#allocation4 + $0x68] sm:$0xff]
          %v916 = vld [vmem:[#allocation4 + $0x70] sm:$0xff]
          %v917 = vld [vmem:[#allocation4 + $0x78] sm:$0xff]
          %s918 = scalar_lea.vmem %s3, %s28
          %v919 = vld [vmem:[%s918] sm:$0x1]
          %v921 = vlaneseq
          %v922 = vshrl.u32 %v921, 7
          %v923 = vsub.s32 0, %v922
          %v924 = vrot.slane %v919, %v923
          %v926 = vadd.f32 %v902, %v924
          %v927 = vadd.f32 %v903, %v924
          %v928 = vadd.f32 %v904, %v924
          %v929 = vadd.f32 %v905, %v924
          %v930 = vadd.f32 %v906, %v924
          %v931 = vadd.f32 %v907, %v924
          %v932 = vadd.f32 %v908, %v924
          %v933 = vadd.f32 %v909, %v924
          %v934 = vadd.f32 %v910, %v924
          %v935 = vadd.f32 %v911, %v924
          %v936 = vadd.f32 %v912, %v924
          %v937 = vadd.f32 %v913, %v924
          %v938 = vadd.f32 %v914, %v924
          %v939 = vadd.f32 %v915, %v924
          %v940 = vadd.f32 %v916, %v924
          %v941 = vadd.f32 %v917, %v924
          %v942 = vmax.f32 %v926, 0.0
          %v943 = vmax.f32 %v927, 0.0
          %v944 = vmax.f32 %v928, 0.0
          %v945 = vmax.f32 %v929, 0.0
          %v946 = vmax.f32 %v930, 0.0
          %v947 = vmax.f32 %v931, 0.0
          %v948 = vmax.f32 %v932, 0.0
          %v949 = vmax.f32 %v933, 0.0
          %v950 = vmax.f32 %v934, 0.0
          %v951 = vmax.f32 %v935, 0.0
          %v952 = vmax.f32 %v936, 0.0
          %v953 = vmax.f32 %v937, 0.0
          %v954 = vmax.f32 %v938, 0.0
          %v955 = vmax.f32 %v939, 0.0
          %v956 = vmax.f32 %v940, 0.0
          %v957 = vmax.f32 %v941, 0.0
          %v958 = vld [vmem:[#allocation11] sm:$0xff]
          %v959 = vld [vmem:[#allocation11 + $0x8] sm:$0xff]
          %v960 = vld [vmem:[#allocation11 + $0x10] sm:$0xff]
          %v961 = vld [vmem:[#allocation11 + $0x18] sm:$0xff]
          %v962 = vld [vmem:[#allocation11 + $0x20] sm:$0xff]
          %v963 = vld [vmem:[#allocation11 + $0x28] sm:$0xff]
          %v964 = vld [vmem:[#allocation11 + $0x30] sm:$0xff]
          %v965 = vld [vmem:[#allocation11 + $0x38] sm:$0xff]
          %v966 = vld [vmem:[#allocation11 + $0x40] sm:$0xff]
          %v967 = vld [vmem:[#allocation11 + $0x48] sm:$0xff]
          %v968 = vld [vmem:[#allocation11 + $0x50] sm:$0xff]
          %v969 = vld [vmem:[#allocation11 + $0x58] sm:$0xff]
          %v970 = vld [vmem:[#allocation11 + $0x60] sm:$0xff]
          %v971 = vld [vmem:[#allocation11 + $0x68] sm:$0xff]
          %v972 = vld [vmem:[#allocation11 + $0x70] sm:$0xff]
          %v973 = vld [vmem:[#allocation11 + $0x78] sm:$0xff]
          %v974 = vld [vmem:[%s5] sm:$0x1]
          %v976 = vlaneseq
          %v977 = vshrl.u32 %v976, 7
          %v978 = vsub.s32 0, %v977
          %v979 = vrot.slane %v974, %v978
          %981 = vmatprep.subr.mxu0 0.0
          %982 = vmatpush1.msra.mxu0 %v958
          %983 = vmatprep.subr.mxu0 0.0
          %984 = vmatpush1.msra.mxu0 %v959
          %985 = vmatprep.subr.mxu0 0.0
          %986 = vmatpush1.msra.mxu0 %v960
          %987 = vmatprep.subr.mxu0 0.0
          %988 = vmatpush1.msra.mxu0 %v961
          %989 = vmatprep.subr.mxu0 0.0
          %990 = vmatpush1.msra.mxu0 %v962
          %991 = vmatprep.subr.mxu0 0.0
          %992 = vmatpush1.msra.mxu0 %v963
          %993 = vmatprep.subr.mxu0 0.0
          %994 = vmatpush1.msra.mxu0 %v964
          %995 = vmatprep.subr.mxu0 0.0
          %996 = vmatpush1.msra.mxu0 %v965
          %997 = vmatprep.subr.mxu0 0.0
          %998 = vmatpush1.msra.mxu0 %v966
          %999 = vmatprep.subr.mxu0 0.0
          %1000 = vmatpush1.msra.mxu0 %v967
          %1001 = vmatprep.subr.mxu0 0.0
          %1002 = vmatpush1.msra.mxu0 %v968
          %1003 = vmatprep.subr.mxu0 0.0
          %1004 = vmatpush1.msra.mxu0 %v969
          %1005 = vmatprep.subr.mxu0 0.0
          %1006 = vmatpush1.msra.mxu0 %v970
          %1007 = vmatprep.subr.mxu0 0.0
          %1008 = vmatpush1.msra.mxu0 %v971
          %1009 = vmatprep.subr.mxu0 0.0
          %1010 = vmatpush1.msra.mxu0 %v972
          %1011 = vmatprep.subr.mxu0 0.0
          %1012 = vmatpush1.msra.mxu0 %v973
          %1013 = vmatprep.subr.mxu0 0.0
          %1014 = vmatpush1.msra.mxu0 0.0
          %1015 = vmatprep.subr.mxu0 0.0
          %1016 = vmatpush1.msra.mxu0 0.0
          %1017 = vmatprep.subr.mxu0 0.0
          %1018 = vmatpush1.msra.mxu0 0.0
          %1019 = vmatprep.subr.mxu0 0.0
          %1020 = vmatpush1.msra.mxu0 0.0
          %1021 = vmatprep.subr.mxu0 0.0
          %1022 = vmatpush1.msra.mxu0 0.0
          %1023 = vmatprep.subr.mxu0 0.0
          %1024 = vmatpush1.msra.mxu0 0.0
          %1025 = vmatprep.subr.mxu0 0.0
          %1026 = vmatpush1.msra.mxu0 0.0
          %1027 = vmatprep.subr.mxu0 0.0
          %1028 = vmatpush1.msra.mxu0 0.0
          %1029 = vmatprep.subr.mxu0 0.0
          %1030 = vmatpush1.msra.mxu0 0.0
          %1031 = vmatprep.subr.mxu0 0.0
          %1032 = vmatpush1.msra.mxu0 0.0
          %1033 = vmatprep.subr.mxu0 0.0
          %1034 = vmatpush1.msra.mxu0 0.0
          %1035 = vmatprep.subr.mxu0 0.0
          %1036 = vmatpush1.msra.mxu0 0.0
          %1037 = vmatprep.subr.mxu0 0.0
          %1038 = vmatpush1.msra.mxu0 0.0
          %1039 = vmatprep.subr.mxu0 0.0
          %1040 = vmatpush1.msra.mxu0 0.0
          %1041 = vmatprep.subr.mxu0 0.0
          %1042 = vmatpush1.msra.mxu0 0.0
          %1043 = vmatprep.subr.mxu0 0.0
          %1044 = vmatpush1.msra.mxu0 0.0
          %1045 = vmatprep.mubr.f32.mxu0 0.0
          %1046 = vmatmul.mubr.f32.gmra.mrb[0].mxu0 %v942
          %v1047 = vpop.f32.mrb[0].mxu0
          %v1048 = vadd.f32 %v979, %v1047
          %v1049 = vpop.f32.mrb[0].mxu0
          %1050 = vmatprep.mubr.f32.mxu0 0.0
          %1051 = vmatmul.mubr.f32.gmra.mrb[0].mxu0 %v943
          %v1052 = vpop.f32.mrb[0].mxu0
          %v1053 = vadd.f32 %v979, %v1052
          %v1054 = vpop.f32.mrb[0].mxu0
          %1055 = vmatprep.mubr.f32.mxu0 0.0
          %1056 = vmatmul.mubr.f32.gmra.mrb[0].mxu0 %v944
          %v1057 = vpop.f32.mrb[0].mxu0
          %v1058 = vadd.f32 %v979, %v1057
          %v1059 = vpop.f32.mrb[0].mxu0
          %1060 = vmatprep.mubr.f32.mxu0 0.0
          %1061 = vmatmul.mubr.f32.gmra.mrb[0].mxu0 %v945
          %v1062 = vpop.f32.mrb[0].mxu0
          %v1063 = vadd.f32 %v979, %v1062
          %v1064 = vpop.f32.mrb[0].mxu0
          %1065 = vmatprep.mubr.f32.mxu0 0.0
          %1066 = vmatmul.mubr.f32.gmra.mrb[0].mxu0 %v946
          %v1067 = vpop.f32.mrb[0].mxu0
          %v1068 = vadd.f32 %v979, %v1067
          %v1069 = vpop.f32.mrb[0].mxu0
          %1070 = vmatprep.mubr.f32.mxu0 0.0
          %1071 = vmatmul.mubr.f32.gmra.mrb[0].mxu0 %v947
          %v1072 = vpop.f32.mrb[0].mxu0
          %v1073 = vadd.f32 %v979, %v1072
          %v1074 = vpop.f32.mrb[0].mxu0
          %1075 = vmatprep.mubr.f32.mxu0 0.0
          %1076 = vmatmul.mubr.f32.gmra.mrb[0].mxu0 %v948
          %v1077 = vpop.f32.mrb[0].mxu0
          %v1078 = vadd.f32 %v979, %v1077
          %v1079 = vpop.f32.mrb[0].mxu0
          %1080 = vmatprep.mubr.f32.mxu0 0.0
          %1081 = vmatmul.mubr.f32.gmra.mrb[0].mxu0 %v949
          %v1082 = vpop.f32.mrb[0].mxu0
          %v1083 = vadd.f32 %v979, %v1082
          %v1084 = vpop.f32.mrb[0].mxu0
          %1085 = vmatprep.mubr.f32.mxu0 0.0
          %1086 = vmatmul.mubr.f32.gmra.mrb[0].mxu0 %v950
          %v1087 = vpop.f32.mrb[0].mxu0
          %v1088 = vadd.f32 %v979, %v1087
          %v1089 = vpop.f32.mrb[0].mxu0
          %1090 = vmatprep.mubr.f32.mxu0 0.0
          %1091 = vmatmul.mubr.f32.gmra.mrb[0].mxu0 %v951
          %v1092 = vpop.f32.mrb[0].mxu0
          %v1093 = vadd.f32 %v979, %v1092
          %v1094 = vpop.f32.mrb[0].mxu0
          %1095 = vmatprep.mubr.f32.mxu0 0.0
          %1096 = vmatmul.mubr.f32.gmra.mrb[0].mxu0 %v952
          %v1097 = vpop.f32.mrb[0].mxu0
          %v1098 = vadd.f32 %v979, %v1097
          %v1099 = vpop.f32.mrb[0].mxu0
          %1100 = vmatprep.mubr.f32.mxu0 0.0
          %1101 = vmatmul.mubr.f32.gmra.mrb[0].mxu0 %v953
          %v1102 = vpop.f32.mrb[0].mxu0
          %v1103 = vadd.f32 %v979, %v1102
          %v1104 = vpop.f32.mrb[0].mxu0
          %1105 = vmatprep.mubr.f32.mxu0 0.0
          %1106 = vmatmul.mubr.f32.gmra.mrb[0].mxu0 %v954
          %v1107 = vpop.f32.mrb[0].mxu0
          %v1108 = vadd.f32 %v979, %v1107
          %v1109 = vpop.f32.mrb[0].mxu0
          %1110 = vmatprep.mubr.f32.mxu0 0.0
          %1111 = vmatmul.mubr.f32.gmra.mrb[0].mxu0 %v955
          %v1112 = vpop.f32.mrb[0].mxu0
          %v1113 = vadd.f32 %v979, %v1112
          %v1114 = vpop.f32.mrb[0].mxu0
          %1115 = vmatprep.mubr.f32.mxu0 0.0
          %1116 = vmatmul.mubr.f32.gmra.mrb[0].mxu0 %v956
          %v1117 = vpop.f32.mrb[0].mxu0
          %v1118 = vadd.f32 %v979, %v1117
          %v1119 = vpop.f32.mrb[0].mxu0
          %1120 = vmatprep.mubr.f32.mxu0 0.0
          %1121 = vmatmul.mubr.f32.gmra.mrb[0].mxu0 %v957
          %v1122 = vpop.f32.mrb[0].mxu0
          %v1123 = vadd.f32 %v979, %v1122
          %v1124 = vpop.f32.mrb[0].mxu0
          %1125 = vdwg.mxu0
          %v1126 = vlaneseq
          %v1127 = vand.u32 %v1126, 127
          %vm1128 = vcmp.lt.s32.totalorder %v1127, 8
          %v1129 = vsel %vm1128, %v1048, -1e+30
          %v1130 = vsel %vm1128, %v1053, -1e+30
          %v1131 = vsel %vm1128, %v1058, -1e+30
          %v1132 = vsel %vm1128, %v1063, -1e+30
          %v1133 = vsel %vm1128, %v1068, -1e+30
          %v1134 = vsel %vm1128, %v1073, -1e+30
          %v1135 = vsel %vm1128, %v1078, -1e+30
          %v1136 = vsel %vm1128, %v1083, -1e+30
          %v1137 = vsel %vm1128, %v1088, -1e+30
          %v1138 = vsel %vm1128, %v1093, -1e+30
          %v1139 = vsel %vm1128, %v1098, -1e+30
          %v1140 = vsel %vm1128, %v1103, -1e+30
          %v1141 = vsel %vm1128, %v1108, -1e+30
          %v1142 = vsel %vm1128, %v1113, -1e+30
          %v1143 = vsel %vm1128, %v1118, -1e+30
          %v1144 = vsel %vm1128, %v1123, -1e+30
          %1145 = vmax.xlane.f32.xlu0 %v1129
          %v1146 = vpop.xlane.xlu0 %1145
          %1147 = vmax.xlane.f32.xlu0 %v1130
          %v1148 = vpop.xlane.xlu0 %1147
          %1149 = vmax.xlane.f32.xlu0 %v1131
          %v1150 = vpop.xlane.xlu0 %1149
          %1151 = vmax.xlane.f32.xlu0 %v1132
          %v1152 = vpop.xlane.xlu0 %1151
          %1153 = vmax.xlane.f32.xlu0 %v1133
          %v1154 = vpop.xlane.xlu0 %1153
          %1155 = vmax.xlane.f32.xlu0 %v1134
          %v1156 = vpop.xlane.xlu0 %1155
          %1157 = vmax.xlane.f32.xlu0 %v1135
          %v1158 = vpop.xlane.xlu0 %1157
          %1159 = vmax.xlane.f32.xlu0 %v1136
          %v1160 = vpop.xlane.xlu0 %1159
          %1161 = vmax.xlane.f32.xlu0 %v1137
          %v1162 = vpop.xlane.xlu0 %1161
          %1163 = vmax.xlane.f32.xlu0 %v1138
          %v1164 = vpop.xlane.xlu0 %1163
          %1165 = vmax.xlane.f32.xlu0 %v1139
          %v1166 = vpop.xlane.xlu0 %1165
          %1167 = vmax.xlane.f32.xlu0 %v1140
          %v1168 = vpop.xlane.xlu0 %1167
          %1169 = vmax.xlane.f32.xlu0 %v1141
          %v1170 = vpop.xlane.xlu0 %1169
          %1171 = vmax.xlane.f32.xlu0 %v1142
          %v1172 = vpop.xlane.xlu0 %1171
          %1173 = vmax.xlane.f32.xlu0 %v1143
          %v1174 = vpop.xlane.xlu0 %1173
          %1175 = vmax.xlane.f32.xlu0 %v1144
          %v1176 = vpop.xlane.xlu0 %1175
          %v1177 = vsub.f32 %v1129, %v1146
          %v1178 = vsub.f32 %v1130, %v1148
          %v1179 = vsub.f32 %v1131, %v1150
          %v1180 = vsub.f32 %v1132, %v1152
          %v1181 = vsub.f32 %v1133, %v1154
          %v1182 = vsub.f32 %v1134, %v1156
          %v1183 = vsub.f32 %v1135, %v1158
          %v1184 = vsub.f32 %v1136, %v1160
          %v1185 = vsub.f32 %v1137, %v1162
          %v1186 = vsub.f32 %v1138, %v1164
          %v1187 = vsub.f32 %v1139, %v1166
          %v1188 = vsub.f32 %v1140, %v1168
          %v1189 = vsub.f32 %v1141, %v1170
          %v1190 = vsub.f32 %v1142, %v1172
          %v1191 = vsub.f32 %v1143, %v1174
          %v1192 = vsub.f32 %v1144, %v1176
          %v1193 = vmul.f32 %v1177, 1.442695
          %v1194 = vpow.pop %v1193
          %v1195 = vmul.f32 %v1178, 1.442695
          %v1196 = vpow.pop %v1195
          %v1197 = vmul.f32 %v1179, 1.442695
          %v1198 = vpow.pop %v1197
          %v1199 = vmul.f32 %v1180, 1.442695
          %v1200 = vpow.pop %v1199
          %v1201 = vmul.f32 %v1181, 1.442695
          %v1202 = vpow.pop %v1201
          %v1203 = vmul.f32 %v1182, 1.442695
          %v1204 = vpow.pop %v1203
          %v1205 = vmul.f32 %v1183, 1.442695
          %v1206 = vpow.pop %v1205
          %v1207 = vmul.f32 %v1184, 1.442695
          %v1208 = vpow.pop %v1207
          %v1209 = vmul.f32 %v1185, 1.442695
          %v1210 = vpow.pop %v1209
          %v1211 = vmul.f32 %v1186, 1.442695
          %v1212 = vpow.pop %v1211
          %v1213 = vmul.f32 %v1187, 1.442695
          %v1214 = vpow.pop %v1213
          %v1215 = vmul.f32 %v1188, 1.442695
          %v1216 = vpow.pop %v1215
          %v1217 = vmul.f32 %v1189, 1.442695
          %v1218 = vpow.pop %v1217
          %v1219 = vmul.f32 %v1190, 1.442695
          %v1220 = vpow.pop %v1219
          %v1221 = vmul.f32 %v1191, 1.442695
          %v1222 = vpow.pop %v1221
          %v1223 = vmul.f32 %v1192, 1.442695
          %v1224 = vpow.pop %v1223
          %1225 = vadd.xlane.f32.xlu0 %v1194
          %v1226 = vpop.xlane.xlu0 %1225
          %1227 = vadd.xlane.f32.xlu0 %v1196
          %v1228 = vpop.xlane.xlu0 %1227
          %1229 = vadd.xlane.f32.xlu0 %v1198
          %v1230 = vpop.xlane.xlu0 %1229
          %1231 = vadd.xlane.f32.xlu0 %v1200
          %v1232 = vpop.xlane.xlu0 %1231
          %1233 = vadd.xlane.f32.xlu0 %v1202
          %v1234 = vpop.xlane.xlu0 %1233
          %1235 = vadd.xlane.f32.xlu0 %v1204
          %v1236 = vpop.xlane.xlu0 %1235
          %1237 = vadd.xlane.f32.xlu0 %v1206
          %v1238 = vpop.xlane.xlu0 %1237
          %1239 = vadd.xlane.f32.xlu0 %v1208
          %v1240 = vpop.xlane.xlu0 %1239
          %1241 = vadd.xlane.f32.xlu0 %v1210
          %v1242 = vpop.xlane.xlu0 %1241
          %1243 = vadd.xlane.f32.xlu0 %v1212
          %v1244 = vpop.xlane.xlu0 %1243
          %1245 = vadd.xlane.f32.xlu0 %v1214
          %v1246 = vpop.xlane.xlu0 %1245
          %1247 = vadd.xlane.f32.xlu0 %v1216
          %v1248 = vpop.xlane.xlu0 %1247
          %1249 = vadd.xlane.f32.xlu0 %v1218
          %v1250 = vpop.xlane.xlu0 %1249
          %1251 = vadd.xlane.f32.xlu0 %v1220
          %v1252 = vpop.xlane.xlu0 %1251
          %1253 = vadd.xlane.f32.xlu0 %v1222
          %v1254 = vpop.xlane.xlu0 %1253
          %1255 = vadd.xlane.f32.xlu0 %v1224
          %v1256 = vpop.xlane.xlu0 %1255
          %v1257 = vlog2.pop %v1226
          %v1258 = vmul.f32 %v1257, 0.6931472
          %v1259 = vlog2.pop %v1228
          %v1260 = vmul.f32 %v1259, 0.6931472
          %v1261 = vlog2.pop %v1230
          %v1262 = vmul.f32 %v1261, 0.6931472
          %v1263 = vlog2.pop %v1232
          %v1264 = vmul.f32 %v1263, 0.6931472
          %v1265 = vlog2.pop %v1234
          %v1266 = vmul.f32 %v1265, 0.6931472
          %v1267 = vlog2.pop %v1236
          %v1268 = vmul.f32 %v1267, 0.6931472
          %v1269 = vlog2.pop %v1238
          %v1270 = vmul.f32 %v1269, 0.6931472
          %v1271 = vlog2.pop %v1240
          %v1272 = vmul.f32 %v1271, 0.6931472
          %v1273 = vlog2.pop %v1242
          %v1274 = vmul.f32 %v1273, 0.6931472
          %v1275 = vlog2.pop %v1244
          %v1276 = vmul.f32 %v1275, 0.6931472
          %v1277 = vlog2.pop %v1246
          %v1278 = vmul.f32 %v1277, 0.6931472
          %v1279 = vlog2.pop %v1248
          %v1280 = vmul.f32 %v1279, 0.6931472
          %v1281 = vlog2.pop %v1250
          %v1282 = vmul.f32 %v1281, 0.6931472
          %v1283 = vlog2.pop %v1252
          %v1284 = vmul.f32 %v1283, 0.6931472
          %v1285 = vlog2.pop %v1254
          %v1286 = vmul.f32 %v1285, 0.6931472
          %v1287 = vlog2.pop %v1256
          %v1288 = vmul.f32 %v1287, 0.6931472
          %v1289 = vsub.f32 %v1177, %v1258
          %v1290 = vsub.f32 %v1178, %v1260
          %v1291 = vsub.f32 %v1179, %v1262
          %v1292 = vsub.f32 %v1180, %v1264
          %v1293 = vsub.f32 %v1181, %v1266
          %v1294 = vsub.f32 %v1182, %v1268
          %v1295 = vsub.f32 %v1183, %v1270
          %v1296 = vsub.f32 %v1184, %v1272
          %v1297 = vsub.f32 %v1185, %v1274
          %v1298 = vsub.f32 %v1186, %v1276
          %v1299 = vsub.f32 %v1187, %v1278
          %v1300 = vsub.f32 %v1188, %v1280
          %v1301 = vsub.f32 %v1189, %v1282
          %v1302 = vsub.f32 %v1190, %v1284
          %v1303 = vsub.f32 %v1191, %v1286
          %v1304 = vsub.f32 %v1192, %v1288
          %1305 = vst [vmem:[%s320] sm:$0xff] %v1289
          %1306 = vst [vmem:[%s320 + $0x8] sm:$0xff] %v1290
          %1307 = vst [vmem:[%s320 + $0x10] sm:$0xff] %v1291
          %1308 = vst [vmem:[%s320 + $0x18] sm:$0xff] %v1292
          %1309 = vst [vmem:[%s320 + $0x20] sm:$0xff] %v1293
          %1310 = vst [vmem:[%s320 + $0x28] sm:$0xff] %v1294
          %1311 = vst [vmem:[%s320 + $0x30] sm:$0xff] %v1295
          %1312 = vst [vmem:[%s320 + $0x38] sm:$0xff] %v1296
          %1313 = vst [vmem:[%s320 + $0x40] sm:$0xff] %v1297
          %1314 = vst [vmem:[%s320 + $0x48] sm:$0xff] %v1298
          %1315 = vst [vmem:[%s320 + $0x50] sm:$0xff] %v1299
          %1316 = vst [vmem:[%s320 + $0x58] sm:$0xff] %v1300
          %1317 = vst [vmem:[%s320 + $0x60] sm:$0xff] %v1301
          %1318 = vst [vmem:[%s320 + $0x68] sm:$0xff] %v1302
          %1319 = vst [vmem:[%s320 + $0x70] sm:$0xff] %v1303
          %1320 = vst [vmem:[%s320 + $0x78] sm:$0xff] %v1304
        $region80: #{tpu_custom_call.1} parent=43 // pred_fallthru
          _
        %s1321 = sand.u32 %s185, 1
        %s1322 = scalar_lea.sflag [#allocation7], %s1321
        %s1323 = sand.u32 %s185, 1
        %s1324 = smul.addr %s1323, 128
        %s1325 = scalar_lea.vmem [#allocation13], %s1324
        // Predicated region
        $region81: #{tpu_custom_call.1} parent=43 // pred_check
          %p1326 = pneg %p195
        $region82: #{tpu_custom_call.1} parent=43 // pred_check_branch
          %1328 = sbr.rel (%p1326) target = $region84
        $region83: #{tpu_custom_call.1} parent=43 // pred_region
          %s1329 = smul.u32 16, %s29
          %s1331 = ssub.s32 2048, 2048
          %1332 = vsyncadd %s1322, %s1331
          %s1333 = smul.addr %s28, 16
          %s1334 = sadd.s32 %s1329, %s1333
          %s1335 = smul.addr %s1334, 128
          %s1336 = scalar_lea.hbm %s6, %s1335
          %s1337 = sshll.u32 %s1325, 4
          %s1338 = int_to_ptr.vmem [resolvable:$true] %s1337
          %1343 = dma.vmem_to_hbm [thread:$0]  %s1338, 2048, %s1336, %s1322, 128, 128, 8
        $region84: #{tpu_custom_call.1} parent=43 // pred_fallthru
          _
      $region44: #{tpu_custom_call.1} parent=5 // pred_fallthru
        _
      %p1344 = scmp.le.s32.totalorder 2, %s18
      // Predicated region
      $region85: #{tpu_custom_call.1} parent=5 // pred_check
        %p1345 = pneg %p1344
      $region86: #{tpu_custom_call.1} parent=5 // pred_check_branch
        %1347 = sbr.rel (%p1345) target = $region88
      $region87: #{tpu_custom_call.1} parent=5 // pred_region
        %s1348 = ssub.s32 %s18, 2
        // Predicated region
        $region89: #{tpu_custom_call.1} parent=87 // pred_check
          %p1349 = pneg %p201
        $region90: #{tpu_custom_call.1} parent=87 // pred_check_branch
          %1351 = sbr.rel (%p1349) target = $region92
        $region91: #{tpu_custom_call.1} parent=87 // pred_region
          %s1352 = sand.u32 %s186, 1
          %s1353 = scalar_lea.sflag [#allocation7], %s1352
          %s1354 = sand.u32 %s186, 1
          %s1355 = smul.addr %s1354, 128
          %s1356 = scalar_lea.vmem [#allocation13], %s1355
          %1357 = dma.done %s1353, 2048
        $region92: #{tpu_custom_call.1} parent=87 // pred_fallthru
          _
      $region88: #{tpu_custom_call.1} parent=5 // pred_fallthru
        _
    $region6: #{tpu_custom_call.1} parent=1 // loop_footer
      %s22 = sadd.s32 1, %s18
    $region7: #{tpu_custom_call.1} parent=1 // loop_footer_branch
      %17 = sbr.rel target = $region3
    $region8: #{tpu_custom_call.1} parent=1 // loop_exit
      _
    %1358 = vsyncpa [#allocation6], 1
    %s1359 = scalar_lea.sflag [#allocation6], 1
    %1360 = vsyncpa %s1359, 1
    %1361 = vsyncpa [#allocation9], 1
    %1362 = vsyncpa [#allocation12], 1
    %1363 = vsyncpa [#allocation7], 1
    %s1364 = scalar_lea.sflag [#allocation7], 1
    %1365 = vsyncpa %s1364, 1

</llo_original>
